<compile_context>
chip_gen: v6e
topology: v6e:2x2x1
jax: 0.10.0
libtpu: 0.0.40
codegen_flags: <defaults>
</compile_context>

<pallas_src>
import functools

import jax
import jax.numpy as jnp
from jax.experimental import pallas as pl
from jax.experimental.pallas import tpu as pltpu

EPS = 1e-5


def _double_conv_kernel(x_ref, b1_ref, g1_ref, be1_ref, b2_ref, g2_ref,
                        be2_ref, gmat_ref, o_ref, xpad_ref, mid_ref,
                        *, n, h, w):
    """Fused DoubleConv forward, fully VMEM resident (sized for toy shapes).

    x_ref   : (N, H, W*Cin)        input rows, channels fastest on the lane axis
    b1_ref  : (3, W*Cin,  W*Cout)  banded conv1 weights (one matrix per ky)
    b2_ref  : (3, W*Cout, W*Cout)  banded conv2 weights
    g*_ref / be*_ref : (1, W*Cout) BN gamma / beta, tiled per lane
    gmat_ref: (W*Cout, W*Cout)     channel-group reduce+broadcast matrix
    o_ref   : (N*H, W*Cout)        lane-dense output rows
    xpad_ref: (N, H+2, W*Cin)      scratch: H-halo padded input
    mid_ref : (N, H+2, W*Cout)     scratch: H-halo padded intermediate
    """
    wcin = x_ref.shape[-1]
    wcout = o_ref.shape[-1]
    m = n * h
    inv_cnt = 1.0 / float(n * h * w)

    gmat = gmat_ref[...]

    def bn_relu(a, g_ref, be_ref):
        # Training-mode BN over (N, H, W) per channel, then affine + ReLU.
        # Row reduction on the vector unit; the W-group reduction + broadcast
        # back to every lane is a single small MXU matmul against gmat.
        s = jnp.sum(a, axis=0, keepdims=True)                        # (1, W*C)
        mean = jnp.dot(s, gmat, preferred_element_type=jnp.float32) * inv_cnt
        c = a - mean                                # reused by the normalization
        q = jnp.sum(c * c, axis=0, keepdims=True)
        var = jnp.dot(q, gmat, preferred_element_type=jnp.float32) * inv_cnt
        scale = g_ref[...] * jax.lax.rsqrt(var + EPS)
        return jnp.maximum(c * scale + be_ref[...], 0.0)

    # ---- conv1: H-halo pad fused in-kernel (zero only the two halo rows) -----
    xpad_ref[:, 0:1, :] = jnp.zeros((n, 1, wcin), jnp.float32)
    xpad_ref[:, h + 1:h + 2, :] = jnp.zeros((n, 1, wcin), jnp.float32)
    xpad_ref[:, 1:h + 1, :] = x_ref[...]

    acc = None
    for dy in range(3):           # 3 banded matmuls: K = W*Cin, N = W*Cout lanes
        lhs = xpad_ref[:, dy:dy + h, :].reshape(m, wcin)
        part = jnp.dot(lhs, b1_ref[dy], preferred_element_type=jnp.float32)
        acc = part if acc is None else acc + part

    y = bn_relu(acc, g1_ref, be1_ref)                                # (N*H, W*Cout)

    # ---- conv2: lane-dense (128-wide) intermediate with H-halo ---------------
    mid_ref[:, 0:1, :] = jnp.zeros((n, 1, wcout), jnp.float32)
    mid_ref[:, h + 1:h + 2, :] = jnp.zeros((n, 1, wcout), jnp.float32)
    mid_ref[:, 1:h + 1, :] = y.reshape(n, h, wcout)

    acc2 = None
    for dy in range(3):
        lhs = mid_ref[:, dy:dy + h, :].reshape(m, wcout)
        part = jnp.dot(lhs, b2_ref[dy], preferred_element_type=jnp.float32)
        acc2 = part if acc2 is None else acc2 + part

    # ---- BN2 + ReLU, lane-dense store -----------------------------------------
    o_ref[...] = bn_relu(acc2, g2_ref, be2_ref)


def _banded_weights(w, width):
    """Fold a (Cout, Cin, 3, 3) conv kernel into 3 banded (W*Cin, W*Cout)
    matrices, one per ky.  The kx taps and the W-direction SAME padding are
    absorbed into the band structure (out-of-range taps are simply dropped).
    Weight prep runs in the wrapper here; in a real model it is precomputed
    once outside the hot path."""
    cout, cin = w.shape[0], w.shape[1]
    mats = []
    for dy in range(3):
        mat = jnp.zeros((width * cin, width * cout), jnp.float32)
        for dx in range(3):
            # S[r, c] = 1 iff r == c + (dx - 1)  -> places tap (dy, dx) of the
            # (Cin, Cout) block at input column (w + dx - 1), output column w.
            shift = jnp.eye(width, k=1 - dx, dtype=jnp.float32)
            blk = jnp.transpose(w[:, :, dy, dx])                     # (Cin, Cout)
            mat = mat + jnp.kron(shift, blk)
        mats.append(mat)
    return jnp.stack(mats)                                           # (3, W*Cin, W*Cout)


def double_conv(x_nchw, params):
    """x_nchw: (N, Cin, H, W) float32 -> (N, Cout, H, W) float32."""
    w1, b1, g1, be1, w2, b2, g2, be2 = params
    del b1, b2  # bias before training-mode BN is cancelled exactly by the mean subtraction
    N, Cin, H, W = x_nchw.shape
    Cout = w1.shape[0]
    wcin, wcout = W * Cin, W * Cout

    # NCHW -> (N, H, W*Cin) row-image layout.
    # TODO(synk): keep the surrounding model end-to-end NHWC so this transpose
    # (a separate XLA op with its own HBM round trip) disappears entirely.
    x_rows = jnp.transpose(x_nchw, (0, 2, 3, 1)).reshape(N, H, wcin)

    b1m = _banded_weights(w1, W)          # (3, W*Cin,  W*Cout)
    b2m = _banded_weights(w2, W)          # (3, W*Cout, W*Cout)

    # BN affine params tiled to one value per lane (lane l = w*Cout + co).
    g1l, be1l = jnp.tile(g1, W)[None, :], jnp.tile(be1, W)[None, :]
    g2l, be2l = jnp.tile(g2, W)[None, :], jnp.tile(be2, W)[None, :]

    # Channel-group matrix: G[i, j] = 1 iff lanes i, j carry the same channel.
    lane = jnp.arange(wcout)
    gmat = (lane[:, None] % Cout == lane[None, :] % Cout).astype(jnp.float32)

    vmem = pl.BlockSpec(memory_space=pltpu.MemorySpace.VMEM)
    out_rows = pl.pallas_call(
        functools.partial(_double_conv_kernel, n=N, h=H, w=W),
        out_shape=jax.ShapeDtypeStruct((N * H, wcout), jnp.float32),
        in_specs=[vmem] * 8,
        out_specs=vmem,
        scratch_shapes=[pltpu.VMEM((N, H + 2, wcin), jnp.float32),
                        pltpu.VMEM((N, H + 2, wcout), jnp.float32)],
        compiler_params=pltpu.CompilerParams(
            vmem_limit_bytes=32 * 1024 * 1024),
    )(x_rows, b1m, g1l, be1l, b2m, g2l, be2l, gmat)
    # TODO(synk): for production UNet shapes, tile with a grid over (N, H-row
    # blocks) and a two-phase BN (accumulate per-channel sum/sumsq across an
    # "arbitrary" axis, then normalize + conv2), mark the row axis "parallel"
    # for v7x's two TensorCores, budget blocks against 64 MiB VMEM, and feed
    # the MXU bf16 operands on v6e/v7x.  The single resident invocation here
    # is sized for the toy shape only.

    return jnp.transpose(out_rows.reshape(N, H, W, Cout), (0, 3, 1, 2))


def reference_double_conv(x_nchw, params):
    """Plain-JAX reference mirroring PyTorch training-mode semantics (NCHW)."""
    w1, b1, g1, be1, w2, b2, g2, be2 = params

    def conv(x, w, b):
        y = jax.lax.conv_general_dilated(
            x, w, window_strides=(1, 1), padding="SAME",
            dimension_numbers=("NCHW", "OIHW", "NCHW"))
        return y + b[None, :, None, None]

    def bn_relu(x, g, be):
        mean = jnp.mean(x, axis=(0, 2, 3), keepdims=True)
        var = jnp.mean(jnp.square(x - mean), axis=(0, 2, 3), keepdims=True)
        y = (x - mean) * jax.lax.rsqrt(var + EPS)
        y = y * g[None, :, None, None] + be[None, :, None, None]
        return jnp.maximum(y, 0.0)

    y = bn_relu(conv(x_nchw, w1, b1), g1, be1)
    return bn_relu(conv(y, w2, b2), g2, be2)


def init_params(key, in_channels, out_channels):
    ks = jax.random.split(key, 8)
    w1 = 0.1 * jax.random.normal(ks[0], (out_channels, in_channels, 3, 3), jnp.float32)
    b1 = 0.1 * jax.random.normal(ks[1], (out_channels,), jnp.float32)
    g1 = 1.0 + 0.1 * jax.random.normal(ks[2], (out_channels,), jnp.float32)
    be1 = 0.1 * jax.random.normal(ks[3], (out_channels,), jnp.float32)
    w2 = 0.1 * jax.random.normal(ks[4], (out_channels, out_channels, 3, 3), jnp.float32)
    b2 = 0.1 * jax.random.normal(ks[5], (out_channels,), jnp.float32)
    g2 = 1.0 + 0.1 * jax.random.normal(ks[6], (out_channels,), jnp.float32)
    be2 = 0.1 * jax.random.normal(ks[7], (out_channels,), jnp.float32)
    return (w1, b1, g1, be1, w2, b2, g2, be2)


if __name__ == "__main__":
    key = jax.random.PRNGKey(0)
    k_x, k_p = jax.random.split(key)

    N, Cin, Cout, H, W = 2, 4, 8, 16, 16
    x = jax.random.normal(k_x, (N, Cin, H, W), jnp.float32)
    params = init_params(k_p, Cin, Cout)

    out = jax.block_until_ready(double_conv(x, params))
    ref = jax.block_until_ready(reference_double_conv(x, params))

    assert out.shape == (N, Cout, H, W), out.shape
    err = float(jnp.max(jnp.abs(out - ref)))
    assert jnp.allclose(out, ref, atol=1e-4, rtol=1e-4), err
    print("KERNEL_OK")
</pallas_src>

<mosaic_0001>
module attributes {stable_mosaic.version = 11 : i64} {
  func.func @_double_conv_kernel(%arg0: memref<2x16x64xf32, #tpu.memory_space<vmem>>, %arg1: memref<3x64x128xf32, #tpu.memory_space<vmem>>, %arg2: memref<1x128xf32, #tpu.memory_space<vmem>>, %arg3: memref<1x128xf32, #tpu.memory_space<vmem>>, %arg4: memref<3x128x128xf32, #tpu.memory_space<vmem>>, %arg5: memref<1x128xf32, #tpu.memory_space<vmem>>, %arg6: memref<1x128xf32, #tpu.memory_space<vmem>>, %arg7: memref<128x128xf32, #tpu.memory_space<vmem>>, %arg8: memref<32x128xf32, #tpu.memory_space<vmem>>, %arg9: memref<2x18x64xf32, #tpu.memory_space<vmem>>, %arg10: memref<2x18x128xf32, #tpu.memory_space<vmem>>) attributes {dimension_semantics = [], scalar_prefetch = 0 : i64, scratch_operands = 2 : i64, tpu.core_type = #tpu.core_type<tc>} {
    %c0 = arith.constant 0 : index
    %c0_0 = arith.constant 0 : index
    %0 = vector.load %arg7[%c0, %c0_0] : memref<128x128xf32, #tpu.memory_space<vmem>>, vector<128x128xf32>
    %cst = arith.constant 0.000000e+00 : f32
    %1 = vector.broadcast %cst : f32 to vector<2x1x64xf32>
    %c0_1 = arith.constant 0 : index
    %c0_2 = arith.constant 0 : index
    %c0_3 = arith.constant 0 : index
    %2 = vector.load %arg9[%c0_1, %c0_2, %c0_3] : memref<2x18x64xf32, #tpu.memory_space<vmem>>, vector<2x1x64xf32>
    tpu.vector_store %arg9[%c0_1, %c0_2, %c0_3], %1 {strides = array<i32>} : memref<2x18x64xf32, #tpu.memory_space<vmem>>, vector<2x1x64xf32>,
    %cst_4 = arith.constant 0.000000e+00 : f32
    %3 = vector.broadcast %cst_4 : f32 to vector<2x1x64xf32>
    %c0_5 = arith.constant 0 : index
    %c17 = arith.constant 17 : index
    %c0_6 = arith.constant 0 : index
    %4 = vector.load %arg9[%c0_5, %c17, %c0_6] : memref<2x18x64xf32, #tpu.memory_space<vmem>>, vector<2x1x64xf32>
    tpu.vector_store %arg9[%c0_5, %c17, %c0_6], %3 {strides = array<i32>} : memref<2x18x64xf32, #tpu.memory_space<vmem>>, vector<2x1x64xf32>,
    %c0_7 = arith.constant 0 : index
    %c0_8 = arith.constant 0 : index
    %c0_9 = arith.constant 0 : index
    %5 = vector.load %arg0[%c0_7, %c0_8, %c0_9] : memref<2x16x64xf32, #tpu.memory_space<vmem>>, vector<2x16x64xf32>
    %c0_10 = arith.constant 0 : index
    %c1 = arith.constant 1 : index
    %c0_11 = arith.constant 0 : index
    %6 = vector.load %arg9[%c0_10, %c1, %c0_11] : memref<2x18x64xf32, #tpu.memory_space<vmem>>, vector<2x16x64xf32>
    tpu.vector_store %arg9[%c0_10, %c1, %c0_11], %5 {strides = array<i32>} : memref<2x18x64xf32, #tpu.memory_space<vmem>>, vector<2x16x64xf32>,
    %c0_12 = arith.constant 0 : index
    %c0_13 = arith.constant 0 : index
    %c0_14 = arith.constant 0 : index
    %7 = vector.load %arg9[%c0_12, %c0_13, %c0_14] : memref<2x18x64xf32, #tpu.memory_space<vmem>>, vector<2x16x64xf32>
    %8 = vector.shape_cast %7 : vector<2x16x64xf32> to vector<32x64xf32>
    %c0_15 = arith.constant 0 : index
    %c0_16 = arith.constant 0 : index
    %c0_17 = arith.constant 0 : index
    %9 = vector.load %arg1[%c0_15, %c0_16, %c0_17] : memref<3x64x128xf32, #tpu.memory_space<vmem>>, vector<1x64x128xf32>
    %10 = vector.shape_cast %9 : vector<1x64x128xf32> to vector<64x128xf32>
    %cst_18 = arith.constant dense<0.000000e+00> : vector<32x128xf32>
    %11 = tpu.matmul %8, %10, %cst_18 {dimension_numbers = #tpu.dot_dimension_numbers<[1], [0], [0], [1], [0, 0, 1, 1], [], []>} : vector<32x64xf32>, vector<64x128xf32>, vector<32x128xf32> -> vector<32x128xf32>
    %c0_19 = arith.constant 0 : index
    %c1_20 = arith.constant 1 : index
    %c0_21 = arith.constant 0 : index
    %12 = vector.load %arg9[%c0_19, %c1_20, %c0_21] : memref<2x18x64xf32, #tpu.memory_space<vmem>>, vector<2x16x64xf32>
    %13 = vector.shape_cast %12 : vector<2x16x64xf32> to vector<32x64xf32>
    %c1_22 = arith.constant 1 : index
    %c0_23 = arith.constant 0 : index
    %c0_24 = arith.constant 0 : index
    %14 = vector.load %arg1[%c1_22, %c0_23, %c0_24] : memref<3x64x128xf32, #tpu.memory_space<vmem>>, vector<1x64x128xf32>
    %15 = vector.shape_cast %14 : vector<1x64x128xf32> to vector<64x128xf32>
    %cst_25 = arith.constant dense<0.000000e+00> : vector<32x128xf32>
    %16 = tpu.matmul %13, %15, %cst_25 {dimension_numbers = #tpu.dot_dimension_numbers<[1], [0], [0], [1], [0, 0, 1, 1], [], []>} : vector<32x64xf32>, vector<64x128xf32>, vector<32x128xf32> -> vector<32x128xf32>
    %17 = arith.addf %11, %16 : vector<32x128xf32>
    %c0_26 = arith.constant 0 : index
    %c2 = arith.constant 2 : index
    %c0_27 = arith.constant 0 : index
    %18 = vector.load %arg9[%c0_26, %c2, %c0_27] : memref<2x18x64xf32, #tpu.memory_space<vmem>>, vector<2x16x64xf32>
    %19 = vector.shape_cast %18 : vector<2x16x64xf32> to vector<32x64xf32>
    %c2_28 = arith.constant 2 : index
    %c0_29 = arith.constant 0 : index
    %c0_30 = arith.constant 0 : index
    %20 = vector.load %arg1[%c2_28, %c0_29, %c0_30] : memref<3x64x128xf32, #tpu.memory_space<vmem>>, vector<1x64x128xf32>
    %21 = vector.shape_cast %20 : vector<1x64x128xf32> to vector<64x128xf32>
    %cst_31 = arith.constant dense<0.000000e+00> : vector<32x128xf32>
    %22 = tpu.matmul %19, %21, %cst_31 {dimension_numbers = #tpu.dot_dimension_numbers<[1], [0], [0], [1], [0, 0, 1, 1], [], []>} : vector<32x64xf32>, vector<64x128xf32>, vector<32x128xf32> -> vector<32x128xf32>
    %23 = arith.addf %17, %22 : vector<32x128xf32>
    %cst_32 = arith.constant dense<0.000000e+00> : vector<128xf32>
    %24 = vector.multi_reduction <add>, %23, %cst_32 [0] : vector<32x128xf32> to vector<128xf32>
    %25 = vector.shape_cast %24 : vector<128xf32> to vector<1x128xf32>
    %cst_33 = arith.constant dense<0.000000e+00> : vector<1x128xf32>
    %26 = tpu.matmul %25, %0, %cst_33 {dimension_numbers = #tpu.dot_dimension_numbers<[1], [0], [0], [1], [0, 0, 1, 1], [], []>} : vector<1x128xf32>, vector<128x128xf32>, vector<1x128xf32> -> vector<1x128xf32>
    %cst_34 = arith.constant 0.001953125 : f32
    %27 = vector.broadcast %cst_34 : f32 to vector<1x128xf32>
    %28 = arith.mulf %26, %27 : vector<1x128xf32>
    %29 = vector.broadcast %28 : vector<1x128xf32> to vector<32x128xf32>
    %30 = arith.subf %23, %29 : vector<32x128xf32>
    %31 = arith.mulf %30, %30 : vector<32x128xf32>
    %cst_35 = arith.constant dense<0.000000e+00> : vector<128xf32>
    %32 = vector.multi_reduction <add>, %31, %cst_35 [0] : vector<32x128xf32> to vector<128xf32>
    %33 = vector.shape_cast %32 : vector<128xf32> to vector<1x128xf32>
    %cst_36 = arith.constant dense<0.000000e+00> : vector<1x128xf32>
    %34 = tpu.matmul %33, %0, %cst_36 {dimension_numbers = #tpu.dot_dimension_numbers<[1], [0], [0], [1], [0, 0, 1, 1], [], []>} : vector<1x128xf32>, vector<128x128xf32>, vector<1x128xf32> -> vector<1x128xf32>
    %cst_37 = arith.constant 0.001953125 : f32
    %35 = vector.broadcast %cst_37 : f32 to vector<1x128xf32>
    %36 = arith.mulf %34, %35 : vector<1x128xf32>
    %c0_38 = arith.constant 0 : index
    %c0_39 = arith.constant 0 : index
    %37 = vector.load %arg2[%c0_38, %c0_39] : memref<1x128xf32, #tpu.memory_space<vmem>>, vector<1x128xf32>
    %cst_40 = arith.constant 9.99999974E-6 : f32
    %38 = vector.broadcast %cst_40 : f32 to vector<1x128xf32>
    %39 = arith.addf %36, %38 : vector<1x128xf32>
    %40 = math.rsqrt %39 : vector<1x128xf32>
    %41 = arith.mulf %37, %40 : vector<1x128xf32>
    %42 = vector.broadcast %41 : vector<1x128xf32> to vector<32x128xf32>
    %43 = arith.mulf %30, %42 : vector<32x128xf32>
    %c0_41 = arith.constant 0 : index
    %c0_42 = arith.constant 0 : index
    %44 = vector.load %arg3[%c0_41, %c0_42] : memref<1x128xf32, #tpu.memory_space<vmem>>, vector<1x128xf32>
    %45 = vector.broadcast %44 : vector<1x128xf32> to vector<32x128xf32>
    %46 = arith.addf %43, %45 : vector<32x128xf32>
    %cst_43 = arith.constant 0.000000e+00 : f32
    %47 = vector.broadcast %cst_43 : f32 to vector<32x128xf32>
    %48 = arith.maximumf %46, %47 : vector<32x128xf32>
    %cst_44 = arith.constant 0.000000e+00 : f32
    %49 = vector.broadcast %cst_44 : f32 to vector<2x1x128xf32>
    %c0_45 = arith.constant 0 : index
    %c0_46 = arith.constant 0 : index
    %c0_47 = arith.constant 0 : index
    %50 = vector.load %arg10[%c0_45, %c0_46, %c0_47] : memref<2x18x128xf32, #tpu.memory_space<vmem>>, vector<2x1x128xf32>
    tpu.vector_store %arg10[%c0_45, %c0_46, %c0_47], %49 {strides = array<i32>} : memref<2x18x128xf32, #tpu.memory_space<vmem>>, vector<2x1x128xf32>,
    %cst_48 = arith.constant 0.000000e+00 : f32
    %51 = vector.broadcast %cst_48 : f32 to vector<2x1x128xf32>
    %c0_49 = arith.constant 0 : index
    %c17_50 = arith.constant 17 : index
    %c0_51 = arith.constant 0 : index
    %52 = vector.load %arg10[%c0_49, %c17_50, %c0_51] : memref<2x18x128xf32, #tpu.memory_space<vmem>>, vector<2x1x128xf32>
    tpu.vector_store %arg10[%c0_49, %c17_50, %c0_51], %51 {strides = array<i32>} : memref<2x18x128xf32, #tpu.memory_space<vmem>>, vector<2x1x128xf32>,
    %53 = vector.shape_cast %48 : vector<32x128xf32> to vector<2x16x128xf32>
    %c0_52 = arith.constant 0 : index
    %c1_53 = arith.constant 1 : index
    %c0_54 = arith.constant 0 : index
    %54 = vector.load %arg10[%c0_52, %c1_53, %c0_54] : memref<2x18x128xf32, #tpu.memory_space<vmem>>, vector<2x16x128xf32>
    tpu.vector_store %arg10[%c0_52, %c1_53, %c0_54], %53 {strides = array<i32>} : memref<2x18x128xf32, #tpu.memory_space<vmem>>, vector<2x16x128xf32>,
    %c0_55 = arith.constant 0 : index
    %c0_56 = arith.constant 0 : index
    %c0_57 = arith.constant 0 : index
    %55 = vector.load %arg10[%c0_55, %c0_56, %c0_57] : memref<2x18x128xf32, #tpu.memory_space<vmem>>, vector<2x16x128xf32>
    %56 = vector.shape_cast %55 : vector<2x16x128xf32> to vector<32x128xf32>
    %c0_58 = arith.constant 0 : index
    %c0_59 = arith.constant 0 : index
    %c0_60 = arith.constant 0 : index
    %57 = vector.load %arg4[%c0_58, %c0_59, %c0_60] : memref<3x128x128xf32, #tpu.memory_space<vmem>>, vector<1x128x128xf32>
    %58 = vector.shape_cast %57 : vector<1x128x128xf32> to vector<128x128xf32>
    %cst_61 = arith.constant dense<0.000000e+00> : vector<32x128xf32>
    %59 = tpu.matmul %56, %58, %cst_61 {dimension_numbers = #tpu.dot_dimension_numbers<[1], [0], [0], [1], [0, 0, 1, 1], [], []>} : vector<32x128xf32>, vector<128x128xf32>, vector<32x128xf32> -> vector<32x128xf32>
    %c0_62 = arith.constant 0 : index
    %c1_63 = arith.constant 1 : index
    %c0_64 = arith.constant 0 : index
    %60 = vector.load %arg10[%c0_62, %c1_63, %c0_64] : memref<2x18x128xf32, #tpu.memory_space<vmem>>, vector<2x16x128xf32>
    %61 = vector.shape_cast %60 : vector<2x16x128xf32> to vector<32x128xf32>
    %c1_65 = arith.constant 1 : index
    %c0_66 = arith.constant 0 : index
    %c0_67 = arith.constant 0 : index
    %62 = vector.load %arg4[%c1_65, %c0_66, %c0_67] : memref<3x128x128xf32, #tpu.memory_space<vmem>>, vector<1x128x128xf32>
    %63 = vector.shape_cast %62 : vector<1x128x128xf32> to vector<128x128xf32>
    %cst_68 = arith.constant dense<0.000000e+00> : vector<32x128xf32>
    %64 = tpu.matmul %61, %63, %cst_68 {dimension_numbers = #tpu.dot_dimension_numbers<[1], [0], [0], [1], [0, 0, 1, 1], [], []>} : vector<32x128xf32>, vector<128x128xf32>, vector<32x128xf32> -> vector<32x128xf32>
    %65 = arith.addf %59, %64 : vector<32x128xf32>
    %c0_69 = arith.constant 0 : index
    %c2_70 = arith.constant 2 : index
    %c0_71 = arith.constant 0 : index
    %66 = vector.load %arg10[%c0_69, %c2_70, %c0_71] : memref<2x18x128xf32, #tpu.memory_space<vmem>>, vector<2x16x128xf32>
    %67 = vector.shape_cast %66 : vector<2x16x128xf32> to vector<32x128xf32>
    %c2_72 = arith.constant 2 : index
    %c0_73 = arith.constant 0 : index
    %c0_74 = arith.constant 0 : index
    %68 = vector.load %arg4[%c2_72, %c0_73, %c0_74] : memref<3x128x128xf32, #tpu.memory_space<vmem>>, vector<1x128x128xf32>
    %69 = vector.shape_cast %68 : vector<1x128x128xf32> to vector<128x128xf32>
    %cst_75 = arith.constant dense<0.000000e+00> : vector<32x128xf32>
    %70 = tpu.matmul %67, %69, %cst_75 {dimension_numbers = #tpu.dot_dimension_numbers<[1], [0], [0], [1], [0, 0, 1, 1], [], []>} : vector<32x128xf32>, vector<128x128xf32>, vector<32x128xf32> -> vector<32x128xf32>
    %71 = arith.addf %65, %70 : vector<32x128xf32>
    %cst_76 = arith.constant dense<0.000000e+00> : vector<128xf32>
    %72 = vector.multi_reduction <add>, %71, %cst_76 [0] : vector<32x128xf32> to vector<128xf32>
    %73 = vector.shape_cast %72 : vector<128xf32> to vector<1x128xf32>
    %cst_77 = arith.constant dense<0.000000e+00> : vector<1x128xf32>
    %74 = tpu.matmul %73, %0, %cst_77 {dimension_numbers = #tpu.dot_dimension_numbers<[1], [0], [0], [1], [0, 0, 1, 1], [], []>} : vector<1x128xf32>, vector<128x128xf32>, vector<1x128xf32> -> vector<1x128xf32>
    %cst_78 = arith.constant 0.001953125 : f32
    %75 = vector.broadcast %cst_78 : f32 to vector<1x128xf32>
    %76 = arith.mulf %74, %75 : vector<1x128xf32>
    %77 = vector.broadcast %76 : vector<1x128xf32> to vector<32x128xf32>
    %78 = arith.subf %71, %77 : vector<32x128xf32>
    %79 = arith.mulf %78, %78 : vector<32x128xf32>
    %cst_79 = arith.constant dense<0.000000e+00> : vector<128xf32>
    %80 = vector.multi_reduction <add>, %79, %cst_79 [0] : vector<32x128xf32> to vector<128xf32>
    %81 = vector.shape_cast %80 : vector<128xf32> to vector<1x128xf32>
    %cst_80 = arith.constant dense<0.000000e+00> : vector<1x128xf32>
    %82 = tpu.matmul %81, %0, %cst_80 {dimension_numbers = #tpu.dot_dimension_numbers<[1], [0], [0], [1], [0, 0, 1, 1], [], []>} : vector<1x128xf32>, vector<128x128xf32>, vector<1x128xf32> -> vector<1x128xf32>
    %cst_81 = arith.constant 0.001953125 : f32
    %83 = vector.broadcast %cst_81 : f32 to vector<1x128xf32>
    %84 = arith.mulf %82, %83 : vector<1x128xf32>
    %c0_82 = arith.constant 0 : index
    %c0_83 = arith.constant 0 : index
    %85 = vector.load %arg5[%c0_82, %c0_83] : memref<1x128xf32, #tpu.memory_space<vmem>>, vector<1x128xf32>
    %cst_84 = arith.constant 9.99999974E-6 : f32
    %86 = vector.broadcast %cst_84 : f32 to vector<1x128xf32>
    %87 = arith.addf %84, %86 : vector<1x128xf32>
    %88 = math.rsqrt %87 : vector<1x128xf32>
    %89 = arith.mulf %85, %88 : vector<1x128xf32>
    %90 = vector.broadcast %89 : vector<1x128xf32> to vector<32x128xf32>
    %91 = arith.mulf %78, %90 : vector<32x128xf32>
    %c0_85 = arith.constant 0 : index
    %c0_86 = arith.constant 0 : index
    %92 = vector.load %arg6[%c0_85, %c0_86] : memref<1x128xf32, #tpu.memory_space<vmem>>, vector<1x128xf32>
    %93 = vector.broadcast %92 : vector<1x128xf32> to vector<32x128xf32>
    %94 = arith.addf %91, %93 : vector<32x128xf32>
    %cst_87 = arith.constant 0.000000e+00 : f32
    %95 = vector.broadcast %cst_87 : f32 to vector<32x128xf32>
    %96 = arith.maximumf %94, %95 : vector<32x128xf32>
    %c0_88 = arith.constant 0 : index
    %c0_89 = arith.constant 0 : index
    %97 = vector.load %arg8[%c0_88, %c0_89] : memref<32x128xf32, #tpu.memory_space<vmem>>, vector<32x128xf32>
    tpu.vector_store %arg8[%c0_88, %c0_89], %96 {strides = array<i32>} : memref<32x128xf32, #tpu.memory_space<vmem>>, vector<32x128xf32>,
    return
  }
}

</mosaic_0001>

<llo_original>
// kernel: tpu_custom_call.1
$region0: #{tpu_custom_call.1}
  #allocation0 [shape = 'u32[]', space=smem, size = 0x4, offset = 0x4, fixed_abs, tag = 'smem constant byte address 0x4 - core index']
  #allocation1 [shape = 'u32[144,128]{1,0:T(1,128)}', space=vmem, size = 0x12000, scoped, tag = 'internal scratch']
  #allocation2 [shape = 'f32[2,18,64]{2,1,0:T(8,128)}', space=vmem, size = 0x6000, scoped, tag = 'scratch operand']
  #allocation3 [shape = 'f32[2,18,128]{2,1,0:T(8,128)}', space=vmem, size = 0x6000, scoped, tag = 'scratch operand']
  %s0 = inlined_call_operand.hbm [shape: f32[2,16,64], index: 0, kind: input, shape index: {}]
  %s1 = inlined_call_operand.hbm [shape: f32[3,64,128], index: 1, kind: input, shape index: {}]
  %s2 = inlined_call_operand.vmem [shape: f32[1,128], index: 2, kind: input, shape index: {}]
  %s3 = inlined_call_operand.vmem [shape: f32[1,128], index: 3, kind: input, shape index: {}]
  %s4 = inlined_call_operand.hbm [shape: f32[3,128,128], index: 4, kind: input, shape index: {}]
  %s5 = inlined_call_operand.vmem [shape: f32[1,128], index: 5, kind: input, shape index: {}]
  %s6 = inlined_call_operand.vmem [shape: f32[1,128], index: 6, kind: input, shape index: {}]
  %s7 = inlined_call_operand.hbm [shape: f32[128,128], index: 7, kind: input, shape index: {}]
  %s8 = inlined_call_operand.hbm [shape: f32[32,128], index: 8, kind: output, shape index: {}]
  %s9 = sld [smem:[#allocation0]]
  $region58: #{tpu_custom_call.1} parent=0
    _
  %s11 = ssub.s32 1, %s9
  %s12 = scalar_select 0, %s11, %s9
  $region1: #{tpu_custom_call.1} parent=0
    #allocation4 [shape = 'u8[16384]{0}', space=vmem, size = 0x4000, scoped, tag = 'input window, operand 0, single buffered']
    #allocation5 [shape = 's32[1]{0}', space=sflag, size = 0x4, scoped, tag = 'scoped memory for tpu_custom_call.1']
    #allocation6 [shape = 's32[1]{0}', space=sflag, size = 0x4, scoped, tag = 'scoped memory for tpu_custom_call.1']
    #allocation7 [shape = 'u8[98304]{0}', space=vmem, size = 0x18000, scoped, tag = 'input window, operand 1, single buffered']
    #allocation8 [shape = 's32[1]{0}', space=sflag, size = 0x4, scoped, tag = 'scoped memory for tpu_custom_call.1']
    #allocation9 [shape = 'u8[196608]{0}', space=vmem, size = 0x30000, scoped, tag = 'input window, operand 4, single buffered']
    #allocation10 [shape = 'u8[65536]{0}', space=vmem, size = 0x10000, scoped, tag = 'input window, operand 7, single buffered']
    #allocation11 [shape = 's32[1]{0}', space=sflag, size = 0x4, scoped, tag = 'scoped memory for tpu_custom_call.1']
    #allocation12 [shape = 'u8[16384]{0}', space=vmem, size = 0x4000, scoped, tag = 'output window, operand 0, single buffered']
    %13 = vsyncpa [#allocation5], 0
    %14 = vsyncpa [#allocation8], 0
    %15 = vsyncpa [#allocation11], 0
    %16 = vsyncpa [#allocation6], 0
    // Predicated region
    $region2: #{tpu_custom_call.1} parent=1 // pred_check
      _
    $region3: #{tpu_custom_call.1} parent=1 // pred_check_branch
      %18 = sbr.rel (0) target = $region5
    $region4: #{tpu_custom_call.1} parent=1 // pred_region
      %s20 = ssub.s32 512, 512
      %21 = vsyncadd [#allocation5], %s20
      %s22 = sshll.u32 [#allocation4], 4
      %s23 = int_to_ptr.vmem [resolvable:$true] %s22
      %28 = dma.hbm_to_vmem [thread:$0]  %s0, 512, %s23, [#allocation5], 128, 128, 8
    $region5: #{tpu_custom_call.1} parent=1 // pred_fallthru
      _
    // Predicated region
    $region6: #{tpu_custom_call.1} parent=1 // pred_check
      _
    $region7: #{tpu_custom_call.1} parent=1 // pred_check_branch
      %30 = sbr.rel (0) target = $region9
    $region8: #{tpu_custom_call.1} parent=1 // pred_region
      %s32 = ssub.s32 3072, 3072
      %33 = vsyncadd [#allocation8], %s32
      %s34 = sshll.u32 [#allocation7], 4
      %s35 = int_to_ptr.vmem [resolvable:$true] %s34
      %40 = dma.hbm_to_vmem [thread:$0]  %s1, 3072, %s35, [#allocation8], 128, 128, 8
    $region9: #{tpu_custom_call.1} parent=1 // pred_fallthru
      _
    // Predicated region
    $region10: #{tpu_custom_call.1} parent=1 // pred_check
      _
    $region11: #{tpu_custom_call.1} parent=1 // pred_check_branch
      %42 = sbr.rel (0) target = $region13
    $region12: #{tpu_custom_call.1} parent=1 // pred_region
      _
    $region13: #{tpu_custom_call.1} parent=1 // pred_fallthru
      _
    // Predicated region
    $region14: #{tpu_custom_call.1} parent=1 // pred_check
      _
    $region15: #{tpu_custom_call.1} parent=1 // pred_check_branch
      %44 = sbr.rel (0) target = $region17
    $region16: #{tpu_custom_call.1} parent=1 // pred_region
      _
    $region17: #{tpu_custom_call.1} parent=1 // pred_fallthru
      _
    // Predicated region
    $region18: #{tpu_custom_call.1} parent=1 // pred_check
      _
    $region19: #{tpu_custom_call.1} parent=1 // pred_check_branch
      %46 = sbr.rel (0) target = $region21
    $region20: #{tpu_custom_call.1} parent=1 // pred_region
      %s48 = ssub.s32 6144, 6144
      %49 = vsyncadd [#allocation8], %s48
      %s50 = sshll.u32 [#allocation9], 4
      %s51 = int_to_ptr.vmem [resolvable:$true] %s50
      %56 = dma.hbm_to_vmem [thread:$0]  %s4, 6144, %s51, [#allocation8], 128, 128, 8
    $region21: #{tpu_custom_call.1} parent=1 // pred_fallthru
      _
    // Predicated region
    $region22: #{tpu_custom_call.1} parent=1 // pred_check
      _
    $region23: #{tpu_custom_call.1} parent=1 // pred_check_branch
      %58 = sbr.rel (0) target = $region25
    $region24: #{tpu_custom_call.1} parent=1 // pred_region
      _
    $region25: #{tpu_custom_call.1} parent=1 // pred_fallthru
      _
    // Predicated region
    $region26: #{tpu_custom_call.1} parent=1 // pred_check
      _
    $region27: #{tpu_custom_call.1} parent=1 // pred_check_branch
      %60 = sbr.rel (0) target = $region29
    $region28: #{tpu_custom_call.1} parent=1 // pred_region
      _
    $region29: #{tpu_custom_call.1} parent=1 // pred_fallthru
      _
    // Predicated region
    $region30: #{tpu_custom_call.1} parent=1 // pred_check
      _
    $region31: #{tpu_custom_call.1} parent=1 // pred_check_branch
      %62 = sbr.rel (0) target = $region33
    $region32: #{tpu_custom_call.1} parent=1 // pred_region
      %s64 = ssub.s32 2048, 2048
      %65 = vsyncadd [#allocation11], %s64
      %s66 = sshll.u32 [#allocation10], 4
      %s67 = int_to_ptr.vmem [resolvable:$true] %s66
      %72 = dma.hbm_to_vmem [thread:$0]  %s7, 2048, %s67, [#allocation11], 128, 128, 8
    $region33: #{tpu_custom_call.1} parent=1 // pred_fallthru
      _
    // Predicated region
    $region34: #{tpu_custom_call.1} parent=1 // pred_check
      _
    $region35: #{tpu_custom_call.1} parent=1 // pred_check_branch
      %74 = sbr.rel (0) target = $region37
    $region36: #{tpu_custom_call.1} parent=1 // pred_region
      %75 = dma.done [#allocation5], 512
    $region37: #{tpu_custom_call.1} parent=1 // pred_fallthru
      _
    // Predicated region
    $region38: #{tpu_custom_call.1} parent=1 // pred_check
      _
    $region39: #{tpu_custom_call.1} parent=1 // pred_check_branch
      %77 = sbr.rel (0) target = $region41
    $region40: #{tpu_custom_call.1} parent=1 // pred_region
      %78 = dma.done [#allocation8], 3072
    $region41: #{tpu_custom_call.1} parent=1 // pred_fallthru
      _
    // Predicated region
    $region42: #{tpu_custom_call.1} parent=1 // pred_check
      _
    $region43: #{tpu_custom_call.1} parent=1 // pred_check_branch
      %80 = sbr.rel (0) target = $region45
    $region44: #{tpu_custom_call.1} parent=1 // pred_region
      %81 = dma.done [#allocation8], 6144
    $region45: #{tpu_custom_call.1} parent=1 // pred_fallthru
      _
    // Predicated region
    $region46: #{tpu_custom_call.1} parent=1 // pred_check
      _
    $region47: #{tpu_custom_call.1} parent=1 // pred_check_branch
      %83 = sbr.rel (0) target = $region49
    $region48: #{tpu_custom_call.1} parent=1 // pred_region
      %84 = dma.done [#allocation11], 2048
    $region49: #{tpu_custom_call.1} parent=1 // pred_fallthru
      _
    %v85 = vld [vmem:[#allocation10] sm:$0xff]
    %v86 = vld [vmem:[#allocation10 + $0x8] sm:$0xff]
    %v87 = vld [vmem:[#allocation10 + $0x10] sm:$0xff]
    %v88 = vld [vmem:[#allocation10 + $0x18] sm:$0xff]
    %v89 = vld [vmem:[#allocation10 + $0x20] sm:$0xff]
    %v90 = vld [vmem:[#allocation10 + $0x28] sm:$0xff]
    %v91 = vld [vmem:[#allocation10 + $0x30] sm:$0xff]
    %v92 = vld [vmem:[#allocation10 + $0x38] sm:$0xff]
    %v93 = vld [vmem:[#allocation10 + $0x40] sm:$0xff]
    %v94 = vld [vmem:[#allocation10 + $0x48] sm:$0xff]
    %v95 = vld [vmem:[#allocation10 + $0x50] sm:$0xff]
    %v96 = vld [vmem:[#allocation10 + $0x58] sm:$0xff]
    %v97 = vld [vmem:[#allocation10 + $0x60] sm:$0xff]
    %v98 = vld [vmem:[#allocation10 + $0x68] sm:$0xff]
    %v99 = vld [vmem:[#allocation10 + $0x70] sm:$0xff]
    %v100 = vld [vmem:[#allocation10 + $0x78] sm:$0xff]
    %vm101 = vcmask 516096
    %102 = vst.msk [vmem:[#allocation2] sm:$0x1] %vm101, 0.0
    %103 = vst.msk [vmem:[#allocation2 + $0x18] sm:$0x1] %vm101, 0.0
    %104 = vst.msk [vmem:[#allocation2 + $0x11] sm:$0x1] %vm101, 0.0
    %105 = vst.msk [vmem:[#allocation2 + $0x29] sm:$0x1] %vm101, 0.0
    %v106 = vld [vmem:[#allocation4] sm:$0xff]
    %v107 = vld [vmem:[#allocation4 + $0x8] sm:$0xff]
    %v108 = vld [vmem:[#allocation4 + $0x10] sm:$0xff]
    %v109 = vld [vmem:[#allocation4 + $0x18] sm:$0xff]
    %vm110 = vcmask 523264
    %111 = vst.msk [vmem:[#allocation2 + $0x1] sm:$0xff] %vm110, %v106
    %112 = vst.msk [vmem:[#allocation2 + $0x9] sm:$0xff] %vm110, %v107
    %113 = vst.msk [vmem:[#allocation2 + $0x19] sm:$0xff] %vm110, %v108
    %114 = vst.msk [vmem:[#allocation2 + $0x21] sm:$0xff] %vm110, %v109
    %v115 = vld [vmem:[#allocation2] sm:$0xff]
    %v116 = vld [vmem:[#allocation2 + $0x8] sm:$0xff]
    %v117 = vld [vmem:[#allocation2 + $0x18] sm:$0xff]
    %v118 = vld [vmem:[#allocation2 + $0x20] sm:$0xff]
    %v119 = vld [vmem:[#allocation7] sm:$0xff]
    %v120 = vld [vmem:[#allocation7 + $0x8] sm:$0xff]
    %v121 = vld [vmem:[#allocation7 + $0x10] sm:$0xff]
    %v122 = vld [vmem:[#allocation7 + $0x18] sm:$0xff]
    %v123 = vld [vmem:[#allocation7 + $0x20] sm:$0xff]
    %v124 = vld [vmem:[#allocation7 + $0x28] sm:$0xff]
    %v125 = vld [vmem:[#allocation7 + $0x30] sm:$0xff]
    %v126 = vld [vmem:[#allocation7 + $0x38] sm:$0xff]
    %v127 = vld [vmem:[#allocation2 + $0x1] sm:$0xff]
    %v128 = vld [vmem:[#allocation2 + $0x9] sm:$0xff]
    %v129 = vld [vmem:[#allocation2 + $0x19] sm:$0xff]
    %v130 = vld [vmem:[#allocation2 + $0x21] sm:$0xff]
    %s131 = scalar_lea.vmem [#allocation7], 64
    %v132 = vld [vmem:[%s131] sm:$0xff]
    %v133 = vld [vmem:[%s131 + $0x8] sm:$0xff]
    %v134 = vld [vmem:[%s131 + $0x10] sm:$0xff]
    %v135 = vld [vmem:[%s131 + $0x18] sm:$0xff]
    %v136 = vld [vmem:[%s131 + $0x20] sm:$0xff]
    %v137 = vld [vmem:[%s131 + $0x28] sm:$0xff]
    %v138 = vld [vmem:[%s131 + $0x30] sm:$0xff]
    %v139 = vld [vmem:[%s131 + $0x38] sm:$0xff]
    %v141 = vsel %vm110, %v127, 0
    %v144 = vsel %vm110, %v128, 0
    %v147 = vsel %vm110, %v129, 0
    %v150 = vsel %vm110, %v130, 0
    %152 = vmatprep.subr.mxu0 0.0
    %153 = vmatpush1.msra.mxu0 0.0
    %154 = vmatprep.subr.mxu0 0.0
    %155 = vmatpush1.msra.mxu0 0.0
    %156 = vmatprep.subr.mxu0 0.0
    %157 = vmatpush1.msra.mxu0 0.0
    %158 = vmatprep.subr.mxu0 0.0
    %159 = vmatpush1.msra.mxu0 0.0
    %160 = vmatprep.subr.mxu0 0.0
    %161 = vmatpush1.msra.mxu0 0.0
    %162 = vmatprep.subr.mxu0 0.0
    %163 = vmatpush1.msra.mxu0 0.0
    %164 = vmatprep.subr.mxu0 0.0
    %165 = vmatpush1.msra.mxu0 0.0
    %166 = vmatprep.subr.mxu0 0.0
    %167 = vmatpush1.msra.mxu0 0.0
    %168 = vmatprep.subr.mxu0 0.0
    %169 = vmatpush1.msra.mxu0 %v139
    %170 = vmatprep.subr.mxu0 0.0
    %171 = vmatpush1.msra.mxu0 %v138
    %172 = vmatprep.subr.mxu0 0.0
    %173 = vmatpush1.msra.mxu0 %v137
    %174 = vmatprep.subr.mxu0 0.0
    %175 = vmatpush1.msra.mxu0 %v136
    %176 = vmatprep.subr.mxu0 0.0
    %177 = vmatpush1.msra.mxu0 %v135
    %178 = vmatprep.subr.mxu0 0.0
    %179 = vmatpush1.msra.mxu0 %v134
    %180 = vmatprep.subr.mxu0 0.0
    %181 = vmatpush1.msra.mxu0 %v133
    %182 = vmatprep.subr.mxu0 0.0
    %183 = vmatpush1.msra.mxu0 %v132
    %184 = vmatprep.subr.mxu0 0.0
    %185 = vmatpush2.msra.mxu0 0.0
    %186 = vmatprep.subr.mxu0 0.0
    %187 = vmatpush2.msra.mxu0 0.0
    %188 = vmatprep.subr.mxu0 0.0
    %189 = vmatpush2.msra.mxu0 0.0
    %190 = vmatprep.subr.mxu0 0.0
    %191 = vmatpush2.msra.mxu0 0.0
    %192 = vmatprep.subr.mxu0 0.0
    %193 = vmatpush2.msra.mxu0 0.0
    %194 = vmatprep.subr.mxu0 0.0
    %195 = vmatpush2.msra.mxu0 0.0
    %196 = vmatprep.subr.mxu0 0.0
    %197 = vmatpush2.msra.mxu0 0.0
    %198 = vmatprep.subr.mxu0 0.0
    %199 = vmatpush2.msra.mxu0 0.0
    %200 = vmatprep.subr.mxu0 0.0
    %201 = vmatpush2.msra.mxu0 0.0
    %202 = vmatprep.subr.mxu0 0.0
    %203 = vmatpush2.msra.mxu0 0.0
    %204 = vmatprep.subr.mxu0 0.0
    %205 = vmatpush2.msra.mxu0 0.0
    %206 = vmatprep.subr.mxu0 0.0
    %207 = vmatpush2.msra.mxu0 0.0
    %208 = vmatprep.subr.mxu0 0.0
    %209 = vmatpush2.msra.mxu0 0.0
    %210 = vmatprep.subr.mxu0 0.0
    %211 = vmatpush2.msra.mxu0 0.0
    %212 = vmatprep.subr.mxu0 0.0
    %213 = vmatpush2.msra.mxu0 0.0
    %214 = vmatprep.subr.mxu0 0.0
    %215 = vmatpush2.msra.mxu0 0.0
    %216 = vmatprep.mubr.f32.mxu0 0.0
    %217 = vmatmul.mubr.f32.gmra.mxu0 %v141
    %v218 = vpop.f32.mrf.mxu0
    %v219 = vadd.f32 0.0, %v218
    %v220 = vpop.f32.mrf.mxu0
    %221 = vmatprep.mubr.f32.mxu0 0.0
    %222 = vmatmul.mubr.f32.gmra.mxu0 %v144
    %v223 = vpop.f32.mrf.mxu0
    %v224 = vadd.f32 0.0, %v223
    %v225 = vpop.f32.mrf.mxu0
    %226 = vmatprep.mubr.f32.mxu0 0.0
    %227 = vmatmul.mubr.f32.gmra.mxu0 %v147
    %v228 = vpop.f32.mrf.mxu0
    %v229 = vadd.f32 0.0, %v228
    %v230 = vpop.f32.mrf.mxu0
    %231 = vmatprep.mubr.f32.mxu0 0.0
    %232 = vmatmul.mubr.f32.gmra.mxu0 %v150
    %v233 = vpop.f32.mrf.mxu0
    %v234 = vadd.f32 0.0, %v233
    %v235 = vpop.f32.mrf.mxu0
    %236 = vdwg.mxu0
    %v238 = vsel %vm110, %v115, 0
    %v241 = vsel %vm110, %v116, 0
    %v244 = vsel %vm110, %v117, 0
    %v247 = vsel %vm110, %v118, 0
    %249 = vmatprep.subr.mxu0 0.0
    %250 = vmatpush1.msra.mxu0 0.0
    %251 = vmatprep.subr.mxu0 0.0
    %252 = vmatpush1.msra.mxu0 0.0
    %253 = vmatprep.subr.mxu0 0.0
    %254 = vmatpush1.msra.mxu0 0.0
    %255 = vmatprep.subr.mxu0 0.0
    %256 = vmatpush1.msra.mxu0 0.0
    %257 = vmatprep.subr.mxu0 0.0
    %258 = vmatpush1.msra.mxu0 0.0
    %259 = vmatprep.subr.mxu0 0.0
    %260 = vmatpush1.msra.mxu0 0.0
    %261 = vmatprep.subr.mxu0 0.0
    %262 = vmatpush1.msra.mxu0 0.0
    %263 = vmatprep.subr.mxu0 0.0
    %264 = vmatpush1.msra.mxu0 0.0
    %265 = vmatprep.subr.mxu0 0.0
    %266 = vmatpush1.msra.mxu0 %v126
    %267 = vmatprep.subr.mxu0 0.0
    %268 = vmatpush1.msra.mxu0 %v125
    %269 = vmatprep.subr.mxu0 0.0
    %270 = vmatpush1.msra.mxu0 %v124
    %271 = vmatprep.subr.mxu0 0.0
    %272 = vmatpush1.msra.mxu0 %v123
    %273 = vmatprep.subr.mxu0 0.0
    %274 = vmatpush1.msra.mxu0 %v122
    %275 = vmatprep.subr.mxu0 0.0
    %276 = vmatpush1.msra.mxu0 %v121
    %277 = vmatprep.subr.mxu0 0.0
    %278 = vmatpush1.msra.mxu0 %v120
    %279 = vmatprep.subr.mxu0 0.0
    %280 = vmatpush1.msra.mxu0 %v119
    %281 = vmatprep.subr.mxu0 0.0
    %282 = vmatpush2.msra.mxu0 0.0
    %283 = vmatprep.subr.mxu0 0.0
    %284 = vmatpush2.msra.mxu0 0.0
    %285 = vmatprep.subr.mxu0 0.0
    %286 = vmatpush2.msra.mxu0 0.0
    %287 = vmatprep.subr.mxu0 0.0
    %288 = vmatpush2.msra.mxu0 0.0
    %289 = vmatprep.subr.mxu0 0.0
    %290 = vmatpush2.msra.mxu0 0.0
    %291 = vmatprep.subr.mxu0 0.0
    %292 = vmatpush2.msra.mxu0 0.0
    %293 = vmatprep.subr.mxu0 0.0
    %294 = vmatpush2.msra.mxu0 0.0
    %295 = vmatprep.subr.mxu0 0.0
    %296 = vmatpush2.msra.mxu0 0.0
    %297 = vmatprep.subr.mxu0 0.0
    %298 = vmatpush2.msra.mxu0 0.0
    %299 = vmatprep.subr.mxu0 0.0
    %300 = vmatpush2.msra.mxu0 0.0
    %301 = vmatprep.subr.mxu0 0.0
    %302 = vmatpush2.msra.mxu0 0.0
    %303 = vmatprep.subr.mxu0 0.0
    %304 = vmatpush2.msra.mxu0 0.0
    %305 = vmatprep.subr.mxu0 0.0
    %306 = vmatpush2.msra.mxu0 0.0
    %307 = vmatprep.subr.mxu0 0.0
    %308 = vmatpush2.msra.mxu0 0.0
    %309 = vmatprep.subr.mxu0 0.0
    %310 = vmatpush2.msra.mxu0 0.0
    %311 = vmatprep.subr.mxu0 0.0
    %312 = vmatpush2.msra.mxu0 0.0
    %313 = vmatprep.mubr.f32.mxu0 0.0
    %314 = vmatmul.mubr.f32.gmra.mxu0 %v238
    %v315 = vpop.f32.mrf.mxu0
    %v316 = vadd.f32 %v219, %v315
    %v317 = vpop.f32.mrf.mxu0
    %318 = vmatprep.mubr.f32.mxu0 0.0
    %319 = vmatmul.mubr.f32.gmra.mxu0 %v241
    %v320 = vpop.f32.mrf.mxu0
    %v321 = vadd.f32 %v224, %v320
    %v322 = vpop.f32.mrf.mxu0
    %323 = vmatprep.mubr.f32.mxu0 0.0
    %324 = vmatmul.mubr.f32.gmra.mxu0 %v244
    %v325 = vpop.f32.mrf.mxu0
    %v326 = vadd.f32 %v229, %v325
    %v327 = vpop.f32.mrf.mxu0
    %328 = vmatprep.mubr.f32.mxu0 0.0
    %329 = vmatmul.mubr.f32.gmra.mxu0 %v247
    %v330 = vpop.f32.mrf.mxu0
    %v331 = vadd.f32 %v234, %v330
    %v332 = vpop.f32.mrf.mxu0
    %333 = vdwg.mxu0
    %v334 = vld [vmem:[#allocation2 + $0x2] sm:$0xff]
    %v335 = vld [vmem:[#allocation2 + $0xa] sm:$0xff]
    %v336 = vld [vmem:[#allocation2 + $0x1a] sm:$0xff]
    %v337 = vld [vmem:[#allocation2 + $0x22] sm:$0xff]
    %s338 = scalar_lea.vmem [#allocation7], 128
    %v339 = vld [vmem:[%s338] sm:$0xff]
    %v340 = vld [vmem:[%s338 + $0x8] sm:$0xff]
    %v341 = vld [vmem:[%s338 + $0x10] sm:$0xff]
    %v342 = vld [vmem:[%s338 + $0x18] sm:$0xff]
    %v343 = vld [vmem:[%s338 + $0x20] sm:$0xff]
    %v344 = vld [vmem:[%s338 + $0x28] sm:$0xff]
    %v345 = vld [vmem:[%s338 + $0x30] sm:$0xff]
    %v346 = vld [vmem:[%s338 + $0x38] sm:$0xff]
    %v348 = vsel %vm110, %v334, 0
    %v351 = vsel %vm110, %v335, 0
    %v354 = vsel %vm110, %v336, 0
    %v357 = vsel %vm110, %v337, 0
    %359 = vmatprep.subr.mxu0 0.0
    %360 = vmatpush1.msra.mxu0 0.0
    %361 = vmatprep.subr.mxu0 0.0
    %362 = vmatpush1.msra.mxu0 0.0
    %363 = vmatprep.subr.mxu0 0.0
    %364 = vmatpush1.msra.mxu0 0.0
    %365 = vmatprep.subr.mxu0 0.0
    %366 = vmatpush1.msra.mxu0 0.0
    %367 = vmatprep.subr.mxu0 0.0
    %368 = vmatpush1.msra.mxu0 0.0
    %369 = vmatprep.subr.mxu0 0.0
    %370 = vmatpush1.msra.mxu0 0.0
    %371 = vmatprep.subr.mxu0 0.0
    %372 = vmatpush1.msra.mxu0 0.0
    %373 = vmatprep.subr.mxu0 0.0
    %374 = vmatpush1.msra.mxu0 0.0
    %375 = vmatprep.subr.mxu0 0.0
    %376 = vmatpush1.msra.mxu0 %v346
    %377 = vmatprep.subr.mxu0 0.0
    %378 = vmatpush1.msra.mxu0 %v345
    %379 = vmatprep.subr.mxu0 0.0
    %380 = vmatpush1.msra.mxu0 %v344
    %381 = vmatprep.subr.mxu0 0.0
    %382 = vmatpush1.msra.mxu0 %v343
    %383 = vmatprep.subr.mxu0 0.0
    %384 = vmatpush1.msra.mxu0 %v342
    %385 = vmatprep.subr.mxu0 0.0
    %386 = vmatpush1.msra.mxu0 %v341
    %387 = vmatprep.subr.mxu0 0.0
    %388 = vmatpush1.msra.mxu0 %v340
    %389 = vmatprep.subr.mxu0 0.0
    %390 = vmatpush1.msra.mxu0 %v339
    %391 = vmatprep.subr.mxu0 0.0
    %392 = vmatpush2.msra.mxu0 0.0
    %393 = vmatprep.subr.mxu0 0.0
    %394 = vmatpush2.msra.mxu0 0.0
    %395 = vmatprep.subr.mxu0 0.0
    %396 = vmatpush2.msra.mxu0 0.0
    %397 = vmatprep.subr.mxu0 0.0
    %398 = vmatpush2.msra.mxu0 0.0
    %399 = vmatprep.subr.mxu0 0.0
    %400 = vmatpush2.msra.mxu0 0.0
    %401 = vmatprep.subr.mxu0 0.0
    %402 = vmatpush2.msra.mxu0 0.0
    %403 = vmatprep.subr.mxu0 0.0
    %404 = vmatpush2.msra.mxu0 0.0
    %405 = vmatprep.subr.mxu0 0.0
    %406 = vmatpush2.msra.mxu0 0.0
    %407 = vmatprep.subr.mxu0 0.0
    %408 = vmatpush2.msra.mxu0 0.0
    %409 = vmatprep.subr.mxu0 0.0
    %410 = vmatpush2.msra.mxu0 0.0
    %411 = vmatprep.subr.mxu0 0.0
    %412 = vmatpush2.msra.mxu0 0.0
    %413 = vmatprep.subr.mxu0 0.0
    %414 = vmatpush2.msra.mxu0 0.0
    %415 = vmatprep.subr.mxu0 0.0
    %416 = vmatpush2.msra.mxu0 0.0
    %417 = vmatprep.subr.mxu0 0.0
    %418 = vmatpush2.msra.mxu0 0.0
    %419 = vmatprep.subr.mxu0 0.0
    %420 = vmatpush2.msra.mxu0 0.0
    %421 = vmatprep.subr.mxu0 0.0
    %422 = vmatpush2.msra.mxu0 0.0
    %423 = vmatprep.mubr.f32.mxu0 0.0
    %424 = vmatmul.mubr.f32.gmra.mxu0 %v348
    %v425 = vpop.f32.mrf.mxu0
    %v426 = vadd.f32 0.0, %v425
    %v427 = vpop.f32.mrf.mxu0
    %428 = vmatprep.mubr.f32.mxu0 0.0
    %429 = vmatmul.mubr.f32.gmra.mxu0 %v351
    %v430 = vpop.f32.mrf.mxu0
    %v431 = vadd.f32 0.0, %v430
    %v432 = vpop.f32.mrf.mxu0
    %433 = vmatprep.mubr.f32.mxu0 0.0
    %434 = vmatmul.mubr.f32.gmra.mxu0 %v354
    %v435 = vpop.f32.mrf.mxu0
    %v436 = vadd.f32 0.0, %v435
    %v437 = vpop.f32.mrf.mxu0
    %438 = vmatprep.mubr.f32.mxu0 0.0
    %439 = vmatmul.mubr.f32.gmra.mxu0 %v357
    %v440 = vpop.f32.mrf.mxu0
    %v441 = vadd.f32 0.0, %v440
    %v442 = vpop.f32.mrf.mxu0
    %443 = vdwg.mxu0
    %v444 = vadd.f32 %v316, %v426
    %v445 = vadd.f32 %v321, %v431
    %v446 = vadd.f32 %v326, %v436
    %v447 = vadd.f32 %v331, %v441
    %v448 = vadd.f32 %v444, %v445
    %v449 = vadd.f32 %v448, %v446
    %v450 = vadd.f32 %v449, %v447
    %v451 = vrot.slane %v450, 4
    %v452 = vadd.f32 %v450, %v451
    %v453 = vrot.slane %v452, 2
    %v454 = vadd.f32 %v452, %v453
    %v455 = vrot.slane %v454, 1
    %v456 = vadd.f32 %v454, %v455
    %457 = vmatprep.subr.mxu0 0.0
    %458 = vmatpush1.msra.mxu0 %v100
    %459 = vmatprep.subr.mxu0 0.0
    %460 = vmatpush1.msra.mxu0 %v99
    %461 = vmatprep.subr.mxu0 0.0
    %462 = vmatpush1.msra.mxu0 %v98
    %463 = vmatprep.subr.mxu0 0.0
    %464 = vmatpush1.msra.mxu0 %v97
    %465 = vmatprep.subr.mxu0 0.0
    %466 = vmatpush1.msra.mxu0 %v96
    %467 = vmatprep.subr.mxu0 0.0
    %468 = vmatpush1.msra.mxu0 %v95
    %469 = vmatprep.subr.mxu0 0.0
    %470 = vmatpush1.msra.mxu0 %v94
    %471 = vmatprep.subr.mxu0 0.0
    %472 = vmatpush1.msra.mxu0 %v93
    %473 = vmatprep.subr.mxu0 0.0
    %474 = vmatpush1.msra.mxu0 %v92
    %475 = vmatprep.subr.mxu0 0.0
    %476 = vmatpush1.msra.mxu0 %v91
    %477 = vmatprep.subr.mxu0 0.0
    %478 = vmatpush1.msra.mxu0 %v90
    %479 = vmatprep.subr.mxu0 0.0
    %480 = vmatpush1.msra.mxu0 %v89
    %481 = vmatprep.subr.mxu0 0.0
    %482 = vmatpush1.msra.mxu0 %v88
    %483 = vmatprep.subr.mxu0 0.0
    %484 = vmatpush1.msra.mxu0 %v87
    %485 = vmatprep.subr.mxu0 0.0
    %486 = vmatpush1.msra.mxu0 %v86
    %487 = vmatprep.subr.mxu0 0.0
    %488 = vmatpush1.msra.mxu0 %v85
    %489 = vmatprep.subr.mxu0 0.0
    %490 = vmatpush2.msra.mxu0 0.0
    %491 = vmatprep.subr.mxu0 0.0
    %492 = vmatpush2.msra.mxu0 0.0
    %493 = vmatprep.subr.mxu0 0.0
    %494 = vmatpush2.msra.mxu0 0.0
    %495 = vmatprep.subr.mxu0 0.0
    %496 = vmatpush2.msra.mxu0 0.0
    %497 = vmatprep.subr.mxu0 0.0
    %498 = vmatpush2.msra.mxu0 0.0
    %499 = vmatprep.subr.mxu0 0.0
    %500 = vmatpush2.msra.mxu0 0.0
    %501 = vmatprep.subr.mxu0 0.0
    %502 = vmatpush2.msra.mxu0 0.0
    %503 = vmatprep.subr.mxu0 0.0
    %504 = vmatpush2.msra.mxu0 0.0
    %505 = vmatprep.subr.mxu0 0.0
    %506 = vmatpush2.msra.mxu0 0.0
    %507 = vmatprep.subr.mxu0 0.0
    %508 = vmatpush2.msra.mxu0 0.0
    %509 = vmatprep.subr.mxu0 0.0
    %510 = vmatpush2.msra.mxu0 0.0
    %511 = vmatprep.subr.mxu0 0.0
    %512 = vmatpush2.msra.mxu0 0.0
    %513 = vmatprep.subr.mxu0 0.0
    %514 = vmatpush2.msra.mxu0 0.0
    %515 = vmatprep.subr.mxu0 0.0
    %516 = vmatpush2.msra.mxu0 0.0
    %517 = vmatprep.subr.mxu0 0.0
    %518 = vmatpush2.msra.mxu0 0.0
    %519 = vmatprep.subr.mxu0 0.0
    %520 = vmatpush2.msra.mxu0 0.0
    %521 = vmatprep.mubr.f32.mxu0 0.0
    %522 = vmatmul.mubr.f32.gmra.mxu0 %v456
    %v523 = vpop.f32.mrf.mxu0
    %v524 = vadd.f32 0.0, %v523
    %v525 = vpop.f32.mrf.mxu0
    %526 = vdwg.mxu0
    %v527 = vmul.f32 %v524, 0.001953125
    %v528 = vlaneseq
    %v529 = vshrl.u32 %v528, 7
    %v530 = vsub.s32 0, %v529
    %v531 = vrot.slane %v527, %v530
    %v532 = vsub.f32 %v444, %v531
    %v533 = vsub.f32 %v445, %v531
    %v534 = vsub.f32 %v446, %v531
    %v535 = vsub.f32 %v447, %v531
    %v536 = vmul.f32 %v532, %v532
    %v537 = vmul.f32 %v533, %v533
    %v538 = vmul.f32 %v534, %v534
    %v539 = vmul.f32 %v535, %v535
    %v540 = vadd.f32 %v536, %v537
    %v541 = vadd.f32 %v540, %v538
    %v542 = vadd.f32 %v541, %v539
    %v543 = vrot.slane %v542, 4
    %v544 = vadd.f32 %v542, %v543
    %v545 = vrot.slane %v544, 2
    %v546 = vadd.f32 %v544, %v545
    %v547 = vrot.slane %v546, 1
    %v548 = vadd.f32 %v546, %v547
    %549 = vmatprep.subr.mxu0 0.0
    %550 = vmatpush1.msra.mxu0 %v100
    %551 = vmatprep.subr.mxu0 0.0
    %552 = vmatpush1.msra.mxu0 %v99
    %553 = vmatprep.subr.mxu0 0.0
    %554 = vmatpush1.msra.mxu0 %v98
    %555 = vmatprep.subr.mxu0 0.0
    %556 = vmatpush1.msra.mxu0 %v97
    %557 = vmatprep.subr.mxu0 0.0
    %558 = vmatpush1.msra.mxu0 %v96
    %559 = vmatprep.subr.mxu0 0.0
    %560 = vmatpush1.msra.mxu0 %v95
    %561 = vmatprep.subr.mxu0 0.0
    %562 = vmatpush1.msra.mxu0 %v94
    %563 = vmatprep.subr.mxu0 0.0
    %564 = vmatpush1.msra.mxu0 %v93
    %565 = vmatprep.subr.mxu0 0.0
    %566 = vmatpush1.msra.mxu0 %v92
    %567 = vmatprep.subr.mxu0 0.0
    %568 = vmatpush1.msra.mxu0 %v91
    %569 = vmatprep.subr.mxu0 0.0
    %570 = vmatpush1.msra.mxu0 %v90
    %571 = vmatprep.subr.mxu0 0.0
    %572 = vmatpush1.msra.mxu0 %v89
    %573 = vmatprep.subr.mxu0 0.0
    %574 = vmatpush1.msra.mxu0 %v88
    %575 = vmatprep.subr.mxu0 0.0
    %576 = vmatpush1.msra.mxu0 %v87
    %577 = vmatprep.subr.mxu0 0.0
    %578 = vmatpush1.msra.mxu0 %v86
    %579 = vmatprep.subr.mxu0 0.0
    %580 = vmatpush1.msra.mxu0 %v85
    %581 = vmatprep.subr.mxu0 0.0
    %582 = vmatpush2.msra.mxu0 0.0
    %583 = vmatprep.subr.mxu0 0.0
    %584 = vmatpush2.msra.mxu0 0.0
    %585 = vmatprep.subr.mxu0 0.0
    %586 = vmatpush2.msra.mxu0 0.0
    %587 = vmatprep.subr.mxu0 0.0
    %588 = vmatpush2.msra.mxu0 0.0
    %589 = vmatprep.subr.mxu0 0.0
    %590 = vmatpush2.msra.mxu0 0.0
    %591 = vmatprep.subr.mxu0 0.0
    %592 = vmatpush2.msra.mxu0 0.0
    %593 = vmatprep.subr.mxu0 0.0
    %594 = vmatpush2.msra.mxu0 0.0
    %595 = vmatprep.subr.mxu0 0.0
    %596 = vmatpush2.msra.mxu0 0.0
    %597 = vmatprep.subr.mxu0 0.0
    %598 = vmatpush2.msra.mxu0 0.0
    %599 = vmatprep.subr.mxu0 0.0
    %600 = vmatpush2.msra.mxu0 0.0
    %601 = vmatprep.subr.mxu0 0.0
    %602 = vmatpush2.msra.mxu0 0.0
    %603 = vmatprep.subr.mxu0 0.0
    %604 = vmatpush2.msra.mxu0 0.0
    %605 = vmatprep.subr.mxu0 0.0
    %606 = vmatpush2.msra.mxu0 0.0
    %607 = vmatprep.subr.mxu0 0.0
    %608 = vmatpush2.msra.mxu0 0.0
    %609 = vmatprep.subr.mxu0 0.0
    %610 = vmatpush2.msra.mxu0 0.0
    %611 = vmatprep.subr.mxu0 0.0
    %612 = vmatpush2.msra.mxu0 0.0
    %613 = vmatprep.mubr.f32.mxu0 0.0
    %614 = vmatmul.mubr.f32.gmra.mxu0 %v548
    %v615 = vpop.f32.mrf.mxu0
    %v616 = vadd.f32 0.0, %v615
    %v617 = vpop.f32.mrf.mxu0
    %618 = vdwg.mxu0
    %v619 = vmul.f32 %v616, 0.001953125
    %v620 = vld [vmem:[%s2] sm:$0x1]
    %v621 = vadd.f32 %v619, 1e-05
    %v622 = vrsqrt.pop %v621
    %v623 = vmul.f32 %v620, %v622
    %v625 = vlaneseq
    %v626 = vshrl.u32 %v625, 7
    %v627 = vsub.s32 0, %v626
    %v628 = vrot.slane %v623, %v627
    %v630 = vmul.f32 %v532, %v628
    %v631 = vmul.f32 %v533, %v628
    %v632 = vmul.f32 %v534, %v628
    %v633 = vmul.f32 %v535, %v628
    %v634 = vld [vmem:[%s3] sm:$0x1]
    %v636 = vlaneseq
    %v637 = vshrl.u32 %v636, 7
    %v638 = vsub.s32 0, %v637
    %v639 = vrot.slane %v634, %v638
    %v641 = vadd.f32 %v630, %v639
    %v642 = vadd.f32 %v631, %v639
    %v643 = vadd.f32 %v632, %v639
    %v644 = vadd.f32 %v633, %v639
    %v645 = vmax.f32 %v641, 0.0
    %v646 = vmax.f32 %v642, 0.0
    %v647 = vmax.f32 %v643, 0.0
    %v648 = vmax.f32 %v644, 0.0
    %649 = vst [vmem:[#allocation3] sm:$0x1] 0.0
    %650 = vst [vmem:[#allocation3 + $0x18] sm:$0x1] 0.0
    %651 = vst [vmem:[#allocation3 + $0x11] sm:$0x1] 0.0
    %652 = vst [vmem:[#allocation3 + $0x29] sm:$0x1] 0.0
    %653 = vst [vmem:[#allocation3 + $0x1] sm:$0xff] %v645
    %654 = vst [vmem:[#allocation3 + $0x9] sm:$0xff] %v646
    %655 = vst [vmem:[#allocation3 + $0x19] sm:$0xff] %v647
    %656 = vst [vmem:[#allocation3 + $0x21] sm:$0xff] %v648
    %v657 = vld [vmem:[#allocation3] sm:$0xff]
    %v658 = vld [vmem:[#allocation3 + $0x8] sm:$0xff]
    %v659 = vld [vmem:[#allocation3 + $0x18] sm:$0xff]
    %v660 = vld [vmem:[#allocation3 + $0x20] sm:$0xff]
    %v661 = vld [vmem:[#allocation9] sm:$0xff]
    %v662 = vld [vmem:[#allocation9 + $0x8] sm:$0xff]
    %v663 = vld [vmem:[#allocation9 + $0x10] sm:$0xff]
    %v664 = vld [vmem:[#allocation9 + $0x18] sm:$0xff]
    %v665 = vld [vmem:[#allocation9 + $0x20] sm:$0xff]
    %v666 = vld [vmem:[#allocation9 + $0x28] sm:$0xff]
    %v667 = vld [vmem:[#allocation9 + $0x30] sm:$0xff]
    %v668 = vld [vmem:[#allocation9 + $0x38] sm:$0xff]
    %v669 = vld [vmem:[#allocation9 + $0x40] sm:$0xff]
    %v670 = vld [vmem:[#allocation9 + $0x48] sm:$0xff]
    %v671 = vld [vmem:[#allocation9 + $0x50] sm:$0xff]
    %v672 = vld [vmem:[#allocation9 + $0x58] sm:$0xff]
    %v673 = vld [vmem:[#allocation9 + $0x60] sm:$0xff]
    %v674 = vld [vmem:[#allocation9 + $0x68] sm:$0xff]
    %v675 = vld [vmem:[#allocation9 + $0x70] sm:$0xff]
    %v676 = vld [vmem:[#allocation9 + $0x78] sm:$0xff]
    %v677 = vld [vmem:[#allocation3 + $0x1] sm:$0xff]
    %v678 = vld [vmem:[#allocation3 + $0x9] sm:$0xff]
    %v679 = vld [vmem:[#allocation3 + $0x19] sm:$0xff]
    %v680 = vld [vmem:[#allocation3 + $0x21] sm:$0xff]
    %s681 = scalar_lea.vmem [#allocation9], 128
    %v682 = vld [vmem:[%s681] sm:$0xff]
    %v683 = vld [vmem:[%s681 + $0x8] sm:$0xff]
    %v684 = vld [vmem:[%s681 + $0x10] sm:$0xff]
    %v685 = vld [vmem:[%s681 + $0x18] sm:$0xff]
    %v686 = vld [vmem:[%s681 + $0x20] sm:$0xff]
    %v687 = vld [vmem:[%s681 + $0x28] sm:$0xff]
    %v688 = vld [vmem:[%s681 + $0x30] sm:$0xff]
    %v689 = vld [vmem:[%s681 + $0x38] sm:$0xff]
    %v690 = vld [vmem:[%s681 + $0x40] sm:$0xff]
    %v691 = vld [vmem:[%s681 + $0x48] sm:$0xff]
    %v692 = vld [vmem:[%s681 + $0x50] sm:$0xff]
    %v693 = vld [vmem:[%s681 + $0x58] sm:$0xff]
    %v694 = vld [vmem:[%s681 + $0x60] sm:$0xff]
    %v695 = vld [vmem:[%s681 + $0x68] sm:$0xff]
    %v696 = vld [vmem:[%s681 + $0x70] sm:$0xff]
    %v697 = vld [vmem:[%s681 + $0x78] sm:$0xff]
    %698 = vmatprep.subr.mxu0 0.0
    %699 = vmatpush1.msra.mxu0 %v697
    %700 = vmatprep.subr.mxu0 0.0
    %701 = vmatpush1.msra.mxu0 %v696
    %702 = vmatprep.subr.mxu0 0.0
    %703 = vmatpush1.msra.mxu0 %v695
    %704 = vmatprep.subr.mxu0 0.0
    %705 = vmatpush1.msra.mxu0 %v694
    %706 = vmatprep.subr.mxu0 0.0
    %707 = vmatpush1.msra.mxu0 %v693
    %708 = vmatprep.subr.mxu0 0.0
    %709 = vmatpush1.msra.mxu0 %v692
    %710 = vmatprep.subr.mxu0 0.0
    %711 = vmatpush1.msra.mxu0 %v691
    %712 = vmatprep.subr.mxu0 0.0
    %713 = vmatpush1.msra.mxu0 %v690
    %714 = vmatprep.subr.mxu0 0.0
    %715 = vmatpush1.msra.mxu0 %v689
    %716 = vmatprep.subr.mxu0 0.0
    %717 = vmatpush1.msra.mxu0 %v688
    %718 = vmatprep.subr.mxu0 0.0
    %719 = vmatpush1.msra.mxu0 %v687
    %720 = vmatprep.subr.mxu0 0.0
    %721 = vmatpush1.msra.mxu0 %v686
    %722 = vmatprep.subr.mxu0 0.0
    %723 = vmatpush1.msra.mxu0 %v685
    %724 = vmatprep.subr.mxu0 0.0
    %725 = vmatpush1.msra.mxu0 %v684
    %726 = vmatprep.subr.mxu0 0.0
    %727 = vmatpush1.msra.mxu0 %v683
    %728 = vmatprep.subr.mxu0 0.0
    %729 = vmatpush1.msra.mxu0 %v682
    %730 = vmatprep.subr.mxu0 0.0
    %731 = vmatpush2.msra.mxu0 0.0
    %732 = vmatprep.subr.mxu0 0.0
    %733 = vmatpush2.msra.mxu0 0.0
    %734 = vmatprep.subr.mxu0 0.0
    %735 = vmatpush2.msra.mxu0 0.0
    %736 = vmatprep.subr.mxu0 0.0
    %737 = vmatpush2.msra.mxu0 0.0
    %738 = vmatprep.subr.mxu0 0.0
    %739 = vmatpush2.msra.mxu0 0.0
    %740 = vmatprep.subr.mxu0 0.0
    %741 = vmatpush2.msra.mxu0 0.0
    %742 = vmatprep.subr.mxu0 0.0
    %743 = vmatpush2.msra.mxu0 0.0
    %744 = vmatprep.subr.mxu0 0.0
    %745 = vmatpush2.msra.mxu0 0.0
    %746 = vmatprep.subr.mxu0 0.0
    %747 = vmatpush2.msra.mxu0 0.0
    %748 = vmatprep.subr.mxu0 0.0
    %749 = vmatpush2.msra.mxu0 0.0
    %750 = vmatprep.subr.mxu0 0.0
    %751 = vmatpush2.msra.mxu0 0.0
    %752 = vmatprep.subr.mxu0 0.0
    %753 = vmatpush2.msra.mxu0 0.0
    %754 = vmatprep.subr.mxu0 0.0
    %755 = vmatpush2.msra.mxu0 0.0
    %756 = vmatprep.subr.mxu0 0.0
    %757 = vmatpush2.msra.mxu0 0.0
    %758 = vmatprep.subr.mxu0 0.0
    %759 = vmatpush2.msra.mxu0 0.0
    %760 = vmatprep.subr.mxu0 0.0
    %761 = vmatpush2.msra.mxu0 0.0
    %762 = vmatprep.mubr.f32.mxu0 0.0
    %763 = vmatmul.mubr.f32.gmra.mxu0 %v677
    %v764 = vpop.f32.mrf.mxu0
    %v765 = vadd.f32 0.0, %v764
    %v766 = vpop.f32.mrf.mxu0
    %767 = vmatprep.mubr.f32.mxu0 0.0
    %768 = vmatmul.mubr.f32.gmra.mxu0 %v678
    %v769 = vpop.f32.mrf.mxu0
    %v770 = vadd.f32 0.0, %v769
    %v771 = vpop.f32.mrf.mxu0
    %772 = vmatprep.mubr.f32.mxu0 0.0
    %773 = vmatmul.mubr.f32.gmra.mxu0 %v679
    %v774 = vpop.f32.mrf.mxu0
    %v775 = vadd.f32 0.0, %v774
    %v776 = vpop.f32.mrf.mxu0
    %777 = vmatprep.mubr.f32.mxu0 0.0
    %778 = vmatmul.mubr.f32.gmra.mxu0 %v680
    %v779 = vpop.f32.mrf.mxu0
    %v780 = vadd.f32 0.0, %v779
    %v781 = vpop.f32.mrf.mxu0
    %782 = vdwg.mxu0
    %783 = vmatprep.subr.mxu0 0.0
    %784 = vmatpush1.msra.mxu0 %v676
    %785 = vmatprep.subr.mxu0 0.0
    %786 = vmatpush1.msra.mxu0 %v675
    %787 = vmatprep.subr.mxu0 0.0
    %788 = vmatpush1.msra.mxu0 %v674
    %789 = vmatprep.subr.mxu0 0.0
    %790 = vmatpush1.msra.mxu0 %v673
    %791 = vmatprep.subr.mxu0 0.0
    %792 = vmatpush1.msra.mxu0 %v672
    %793 = vmatprep.subr.mxu0 0.0
    %794 = vmatpush1.msra.mxu0 %v671
    %795 = vmatprep.subr.mxu0 0.0
    %796 = vmatpush1.msra.mxu0 %v670
    %797 = vmatprep.subr.mxu0 0.0
    %798 = vmatpush1.msra.mxu0 %v669
    %799 = vmatprep.subr.mxu0 0.0
    %800 = vmatpush1.msra.mxu0 %v668
    %801 = vmatprep.subr.mxu0 0.0
    %802 = vmatpush1.msra.mxu0 %v667
    %803 = vmatprep.subr.mxu0 0.0
    %804 = vmatpush1.msra.mxu0 %v666
    %805 = vmatprep.subr.mxu0 0.0
    %806 = vmatpush1.msra.mxu0 %v665
    %807 = vmatprep.subr.mxu0 0.0
    %808 = vmatpush1.msra.mxu0 %v664
    %809 = vmatprep.subr.mxu0 0.0
    %810 = vmatpush1.msra.mxu0 %v663
    %811 = vmatprep.subr.mxu0 0.0
    %812 = vmatpush1.msra.mxu0 %v662
    %813 = vmatprep.subr.mxu0 0.0
    %814 = vmatpush1.msra.mxu0 %v661
    %815 = vmatprep.subr.mxu0 0.0
    %816 = vmatpush2.msra.mxu0 0.0
    %817 = vmatprep.subr.mxu0 0.0
    %818 = vmatpush2.msra.mxu0 0.0
    %819 = vmatprep.subr.mxu0 0.0
    %820 = vmatpush2.msra.mxu0 0.0
    %821 = vmatprep.subr.mxu0 0.0
    %822 = vmatpush2.msra.mxu0 0.0
    %823 = vmatprep.subr.mxu0 0.0
    %824 = vmatpush2.msra.mxu0 0.0
    %825 = vmatprep.subr.mxu0 0.0
    %826 = vmatpush2.msra.mxu0 0.0
    %827 = vmatprep.subr.mxu0 0.0
    %828 = vmatpush2.msra.mxu0 0.0
    %829 = vmatprep.subr.mxu0 0.0
    %830 = vmatpush2.msra.mxu0 0.0
    %831 = vmatprep.subr.mxu0 0.0
    %832 = vmatpush2.msra.mxu0 0.0
    %833 = vmatprep.subr.mxu0 0.0
    %834 = vmatpush2.msra.mxu0 0.0
    %835 = vmatprep.subr.mxu0 0.0
    %836 = vmatpush2.msra.mxu0 0.0
    %837 = vmatprep.subr.mxu0 0.0
    %838 = vmatpush2.msra.mxu0 0.0
    %839 = vmatprep.subr.mxu0 0.0
    %840 = vmatpush2.msra.mxu0 0.0
    %841 = vmatprep.subr.mxu0 0.0
    %842 = vmatpush2.msra.mxu0 0.0
    %843 = vmatprep.subr.mxu0 0.0
    %844 = vmatpush2.msra.mxu0 0.0
    %845 = vmatprep.subr.mxu0 0.0
    %846 = vmatpush2.msra.mxu0 0.0
    %847 = vmatprep.mubr.f32.mxu0 0.0
    %848 = vmatmul.mubr.f32.gmra.mxu0 %v657
    %v849 = vpop.f32.mrf.mxu0
    %v850 = vadd.f32 %v765, %v849
    %v851 = vpop.f32.mrf.mxu0
    %852 = vmatprep.mubr.f32.mxu0 0.0
    %853 = vmatmul.mubr.f32.gmra.mxu0 %v658
    %v854 = vpop.f32.mrf.mxu0
    %v855 = vadd.f32 %v770, %v854
    %v856 = vpop.f32.mrf.mxu0
    %857 = vmatprep.mubr.f32.mxu0 0.0
    %858 = vmatmul.mubr.f32.gmra.mxu0 %v659
    %v859 = vpop.f32.mrf.mxu0
    %v860 = vadd.f32 %v775, %v859
    %v861 = vpop.f32.mrf.mxu0
    %862 = vmatprep.mubr.f32.mxu0 0.0
    %863 = vmatmul.mubr.f32.gmra.mxu0 %v660
    %v864 = vpop.f32.mrf.mxu0
    %v865 = vadd.f32 %v780, %v864
    %v866 = vpop.f32.mrf.mxu0
    %867 = vdwg.mxu0
    %v868 = vld [vmem:[#allocation3 + $0x2] sm:$0xff]
    %v869 = vld [vmem:[#allocation3 + $0xa] sm:$0xff]
    %v870 = vld [vmem:[#allocation3 + $0x1a] sm:$0xff]
    %v871 = vld [vmem:[#allocation3 + $0x22] sm:$0xff]
    %s872 = scalar_lea.vmem [#allocation9], 256
    %v873 = vld [vmem:[%s872] sm:$0xff]
    %v874 = vld [vmem:[%s872 + $0x8] sm:$0xff]
    %v875 = vld [vmem:[%s872 + $0x10] sm:$0xff]
    %v876 = vld [vmem:[%s872 + $0x18] sm:$0xff]
    %v877 = vld [vmem:[%s872 + $0x20] sm:$0xff]
    %v878 = vld [vmem:[%s872 + $0x28] sm:$0xff]
    %v879 = vld [vmem:[%s872 + $0x30] sm:$0xff]
    %v880 = vld [vmem:[%s872 + $0x38] sm:$0xff]
    %v881 = vld [vmem:[%s872 + $0x40] sm:$0xff]
    %v882 = vld [vmem:[%s872 + $0x48] sm:$0xff]
    %v883 = vld [vmem:[%s872 + $0x50] sm:$0xff]
    %v884 = vld [vmem:[%s872 + $0x58] sm:$0xff]
    %v885 = vld [vmem:[%s872 + $0x60] sm:$0xff]
    %v886 = vld [vmem:[%s872 + $0x68] sm:$0xff]
    %v887 = vld [vmem:[%s872 + $0x70] sm:$0xff]
    %v888 = vld [vmem:[%s872 + $0x78] sm:$0xff]
    %889 = vmatprep.subr.mxu0 0.0
    %890 = vmatpush1.msra.mxu0 %v888
    %891 = vmatprep.subr.mxu0 0.0
    %892 = vmatpush1.msra.mxu0 %v887
    %893 = vmatprep.subr.mxu0 0.0
    %894 = vmatpush1.msra.mxu0 %v886
    %895 = vmatprep.subr.mxu0 0.0
    %896 = vmatpush1.msra.mxu0 %v885
    %897 = vmatprep.subr.mxu0 0.0
    %898 = vmatpush1.msra.mxu0 %v884
    %899 = vmatprep.subr.mxu0 0.0
    %900 = vmatpush1.msra.mxu0 %v883
    %901 = vmatprep.subr.mxu0 0.0
    %902 = vmatpush1.msra.mxu0 %v882
    %903 = vmatprep.subr.mxu0 0.0
    %904 = vmatpush1.msra.mxu0 %v881
    %905 = vmatprep.subr.mxu0 0.0
    %906 = vmatpush1.msra.mxu0 %v880
    %907 = vmatprep.subr.mxu0 0.0
    %908 = vmatpush1.msra.mxu0 %v879
    %909 = vmatprep.subr.mxu0 0.0
    %910 = vmatpush1.msra.mxu0 %v878
    %911 = vmatprep.subr.mxu0 0.0
    %912 = vmatpush1.msra.mxu0 %v877
    %913 = vmatprep.subr.mxu0 0.0
    %914 = vmatpush1.msra.mxu0 %v876
    %915 = vmatprep.subr.mxu0 0.0
    %916 = vmatpush1.msra.mxu0 %v875
    %917 = vmatprep.subr.mxu0 0.0
    %918 = vmatpush1.msra.mxu0 %v874
    %919 = vmatprep.subr.mxu0 0.0
    %920 = vmatpush1.msra.mxu0 %v873
    %921 = vmatprep.subr.mxu0 0.0
    %922 = vmatpush2.msra.mxu0 0.0
    %923 = vmatprep.subr.mxu0 0.0
    %924 = vmatpush2.msra.mxu0 0.0
    %925 = vmatprep.subr.mxu0 0.0
    %926 = vmatpush2.msra.mxu0 0.0
    %927 = vmatprep.subr.mxu0 0.0
    %928 = vmatpush2.msra.mxu0 0.0
    %929 = vmatprep.subr.mxu0 0.0
    %930 = vmatpush2.msra.mxu0 0.0
    %931 = vmatprep.subr.mxu0 0.0
    %932 = vmatpush2.msra.mxu0 0.0
    %933 = vmatprep.subr.mxu0 0.0
    %934 = vmatpush2.msra.mxu0 0.0
    %935 = vmatprep.subr.mxu0 0.0
    %936 = vmatpush2.msra.mxu0 0.0
    %937 = vmatprep.subr.mxu0 0.0
    %938 = vmatpush2.msra.mxu0 0.0
    %939 = vmatprep.subr.mxu0 0.0
    %940 = vmatpush2.msra.mxu0 0.0
    %941 = vmatprep.subr.mxu0 0.0
    %942 = vmatpush2.msra.mxu0 0.0
    %943 = vmatprep.subr.mxu0 0.0
    %944 = vmatpush2.msra.mxu0 0.0
    %945 = vmatprep.subr.mxu0 0.0
    %946 = vmatpush2.msra.mxu0 0.0
    %947 = vmatprep.subr.mxu0 0.0
    %948 = vmatpush2.msra.mxu0 0.0
    %949 = vmatprep.subr.mxu0 0.0
    %950 = vmatpush2.msra.mxu0 0.0
    %951 = vmatprep.subr.mxu0 0.0
    %952 = vmatpush2.msra.mxu0 0.0
    %953 = vmatprep.mubr.f32.mxu0 0.0
    %954 = vmatmul.mubr.f32.gmra.mxu0 %v868
    %v955 = vpop.f32.mrf.mxu0
    %v956 = vadd.f32 0.0, %v955
    %v957 = vpop.f32.mrf.mxu0
    %958 = vmatprep.mubr.f32.mxu0 0.0
    %959 = vmatmul.mubr.f32.gmra.mxu0 %v869
    %v960 = vpop.f32.mrf.mxu0
    %v961 = vadd.f32 0.0, %v960
    %v962 = vpop.f32.mrf.mxu0
    %963 = vmatprep.mubr.f32.mxu0 0.0
    %964 = vmatmul.mubr.f32.gmra.mxu0 %v870
    %v965 = vpop.f32.mrf.mxu0
    %v966 = vadd.f32 0.0, %v965
    %v967 = vpop.f32.mrf.mxu0
    %968 = vmatprep.mubr.f32.mxu0 0.0
    %969 = vmatmul.mubr.f32.gmra.mxu0 %v871
    %v970 = vpop.f32.mrf.mxu0
    %v971 = vadd.f32 0.0, %v970
    %v972 = vpop.f32.mrf.mxu0
    %973 = vdwg.mxu0
    %v974 = vadd.f32 %v850, %v956
    %v975 = vadd.f32 %v855, %v961
    %v976 = vadd.f32 %v860, %v966
    %v977 = vadd.f32 %v865, %v971
    %v978 = vadd.f32 %v974, %v975
    %v979 = vadd.f32 %v978, %v976
    %v980 = vadd.f32 %v979, %v977
    %v981 = vrot.slane %v980, 4
    %v982 = vadd.f32 %v980, %v981
    %v983 = vrot.slane %v982, 2
    %v984 = vadd.f32 %v982, %v983
    %v985 = vrot.slane %v984, 1
    %v986 = vadd.f32 %v984, %v985
    %987 = vmatprep.subr.mxu0 0.0
    %988 = vmatpush1.msra.mxu0 %v100
    %989 = vmatprep.subr.mxu0 0.0
    %990 = vmatpush1.msra.mxu0 %v99
    %991 = vmatprep.subr.mxu0 0.0
    %992 = vmatpush1.msra.mxu0 %v98
    %993 = vmatprep.subr.mxu0 0.0
    %994 = vmatpush1.msra.mxu0 %v97
    %995 = vmatprep.subr.mxu0 0.0
    %996 = vmatpush1.msra.mxu0 %v96
    %997 = vmatprep.subr.mxu0 0.0
    %998 = vmatpush1.msra.mxu0 %v95
    %999 = vmatprep.subr.mxu0 0.0
    %1000 = vmatpush1.msra.mxu0 %v94
    %1001 = vmatprep.subr.mxu0 0.0
    %1002 = vmatpush1.msra.mxu0 %v93
    %1003 = vmatprep.subr.mxu0 0.0
    %1004 = vmatpush1.msra.mxu0 %v92
    %1005 = vmatprep.subr.mxu0 0.0
    %1006 = vmatpush1.msra.mxu0 %v91
    %1007 = vmatprep.subr.mxu0 0.0
    %1008 = vmatpush1.msra.mxu0 %v90
    %1009 = vmatprep.subr.mxu0 0.0
    %1010 = vmatpush1.msra.mxu0 %v89
    %1011 = vmatprep.subr.mxu0 0.0
    %1012 = vmatpush1.msra.mxu0 %v88
    %1013 = vmatprep.subr.mxu0 0.0
    %1014 = vmatpush1.msra.mxu0 %v87
    %1015 = vmatprep.subr.mxu0 0.0
    %1016 = vmatpush1.msra.mxu0 %v86
    %1017 = vmatprep.subr.mxu0 0.0
    %1018 = vmatpush1.msra.mxu0 %v85
    %1019 = vmatprep.subr.mxu0 0.0
    %1020 = vmatpush2.msra.mxu0 0.0
    %1021 = vmatprep.subr.mxu0 0.0
    %1022 = vmatpush2.msra.mxu0 0.0
    %1023 = vmatprep.subr.mxu0 0.0
    %1024 = vmatpush2.msra.mxu0 0.0
    %1025 = vmatprep.subr.mxu0 0.0
    %1026 = vmatpush2.msra.mxu0 0.0
    %1027 = vmatprep.subr.mxu0 0.0
    %1028 = vmatpush2.msra.mxu0 0.0
    %1029 = vmatprep.subr.mxu0 0.0
    %1030 = vmatpush2.msra.mxu0 0.0
    %1031 = vmatprep.subr.mxu0 0.0
    %1032 = vmatpush2.msra.mxu0 0.0
    %1033 = vmatprep.subr.mxu0 0.0
    %1034 = vmatpush2.msra.mxu0 0.0
    %1035 = vmatprep.subr.mxu0 0.0
    %1036 = vmatpush2.msra.mxu0 0.0
    %1037 = vmatprep.subr.mxu0 0.0
    %1038 = vmatpush2.msra.mxu0 0.0
    %1039 = vmatprep.subr.mxu0 0.0
    %1040 = vmatpush2.msra.mxu0 0.0
    %1041 = vmatprep.subr.mxu0 0.0
    %1042 = vmatpush2.msra.mxu0 0.0
    %1043 = vmatprep.subr.mxu0 0.0
    %1044 = vmatpush2.msra.mxu0 0.0
    %1045 = vmatprep.subr.mxu0 0.0
    %1046 = vmatpush2.msra.mxu0 0.0
    %1047 = vmatprep.subr.mxu0 0.0
    %1048 = vmatpush2.msra.mxu0 0.0
    %1049 = vmatprep.subr.mxu0 0.0
    %1050 = vmatpush2.msra.mxu0 0.0
    %1051 = vmatprep.mubr.f32.mxu0 0.0
    %1052 = vmatmul.mubr.f32.gmra.mxu0 %v986
    %v1053 = vpop.f32.mrf.mxu0
    %v1054 = vadd.f32 0.0, %v1053
    %v1055 = vpop.f32.mrf.mxu0
    %1056 = vdwg.mxu0
    %v1057 = vmul.f32 %v1054, 0.001953125
    %v1058 = vlaneseq
    %v1059 = vshrl.u32 %v1058, 7
    %v1060 = vsub.s32 0, %v1059
    %v1061 = vrot.slane %v1057, %v1060
    %v1062 = vsub.f32 %v974, %v1061
    %v1063 = vsub.f32 %v975, %v1061
    %v1064 = vsub.f32 %v976, %v1061
    %v1065 = vsub.f32 %v977, %v1061
    %v1066 = vmul.f32 %v1062, %v1062
    %v1067 = vmul.f32 %v1063, %v1063
    %v1068 = vmul.f32 %v1064, %v1064
    %v1069 = vmul.f32 %v1065, %v1065
    %v1070 = vadd.f32 %v1066, %v1067
    %v1071 = vadd.f32 %v1070, %v1068
    %v1072 = vadd.f32 %v1071, %v1069
    %v1073 = vrot.slane %v1072, 4
    %v1074 = vadd.f32 %v1072, %v1073
    %v1075 = vrot.slane %v1074, 2
    %v1076 = vadd.f32 %v1074, %v1075
    %v1077 = vrot.slane %v1076, 1
    %v1078 = vadd.f32 %v1076, %v1077
    %1079 = vmatprep.subr.mxu0 0.0
    %1080 = vmatpush1.msra.mxu0 %v100
    %1081 = vmatprep.subr.mxu0 0.0
    %1082 = vmatpush1.msra.mxu0 %v99
    %1083 = vmatprep.subr.mxu0 0.0
    %1084 = vmatpush1.msra.mxu0 %v98
    %1085 = vmatprep.subr.mxu0 0.0
    %1086 = vmatpush1.msra.mxu0 %v97
    %1087 = vmatprep.subr.mxu0 0.0
    %1088 = vmatpush1.msra.mxu0 %v96
    %1089 = vmatprep.subr.mxu0 0.0
    %1090 = vmatpush1.msra.mxu0 %v95
    %1091 = vmatprep.subr.mxu0 0.0
    %1092 = vmatpush1.msra.mxu0 %v94
    %1093 = vmatprep.subr.mxu0 0.0
    %1094 = vmatpush1.msra.mxu0 %v93
    %1095 = vmatprep.subr.mxu0 0.0
    %1096 = vmatpush1.msra.mxu0 %v92
    %1097 = vmatprep.subr.mxu0 0.0
    %1098 = vmatpush1.msra.mxu0 %v91
    %1099 = vmatprep.subr.mxu0 0.0
    %1100 = vmatpush1.msra.mxu0 %v90
    %1101 = vmatprep.subr.mxu0 0.0
    %1102 = vmatpush1.msra.mxu0 %v89
    %1103 = vmatprep.subr.mxu0 0.0
    %1104 = vmatpush1.msra.mxu0 %v88
    %1105 = vmatprep.subr.mxu0 0.0
    %1106 = vmatpush1.msra.mxu0 %v87
    %1107 = vmatprep.subr.mxu0 0.0
    %1108 = vmatpush1.msra.mxu0 %v86
    %1109 = vmatprep.subr.mxu0 0.0
    %1110 = vmatpush1.msra.mxu0 %v85
    %1111 = vmatprep.subr.mxu0 0.0
    %1112 = vmatpush2.msra.mxu0 0.0
    %1113 = vmatprep.subr.mxu0 0.0
    %1114 = vmatpush2.msra.mxu0 0.0
    %1115 = vmatprep.subr.mxu0 0.0
    %1116 = vmatpush2.msra.mxu0 0.0
    %1117 = vmatprep.subr.mxu0 0.0
    %1118 = vmatpush2.msra.mxu0 0.0
    %1119 = vmatprep.subr.mxu0 0.0
    %1120 = vmatpush2.msra.mxu0 0.0
    %1121 = vmatprep.subr.mxu0 0.0
    %1122 = vmatpush2.msra.mxu0 0.0
    %1123 = vmatprep.subr.mxu0 0.0
    %1124 = vmatpush2.msra.mxu0 0.0
    %1125 = vmatprep.subr.mxu0 0.0
    %1126 = vmatpush2.msra.mxu0 0.0
    %1127 = vmatprep.subr.mxu0 0.0
    %1128 = vmatpush2.msra.mxu0 0.0
    %1129 = vmatprep.subr.mxu0 0.0
    %1130 = vmatpush2.msra.mxu0 0.0
    %1131 = vmatprep.subr.mxu0 0.0
    %1132 = vmatpush2.msra.mxu0 0.0
    %1133 = vmatprep.subr.mxu0 0.0
    %1134 = vmatpush2.msra.mxu0 0.0
    %1135 = vmatprep.subr.mxu0 0.0
    %1136 = vmatpush2.msra.mxu0 0.0
    %1137 = vmatprep.subr.mxu0 0.0
    %1138 = vmatpush2.msra.mxu0 0.0
    %1139 = vmatprep.subr.mxu0 0.0
    %1140 = vmatpush2.msra.mxu0 0.0
    %1141 = vmatprep.subr.mxu0 0.0
    %1142 = vmatpush2.msra.mxu0 0.0
    %1143 = vmatprep.mubr.f32.mxu0 0.0
    %1144 = vmatmul.mubr.f32.gmra.mxu0 %v1078
    %v1145 = vpop.f32.mrf.mxu0
    %v1146 = vadd.f32 0.0, %v1145
    %v1147 = vpop.f32.mrf.mxu0
    %1148 = vdwg.mxu0
    %v1149 = vmul.f32 %v1146, 0.001953125
    %v1150 = vld [vmem:[%s5] sm:$0x1]
    %v1151 = vadd.f32 %v1149, 1e-05
    %v1152 = vrsqrt.pop %v1151
    %v1153 = vmul.f32 %v1150, %v1152
    %v1155 = vlaneseq
    %v1156 = vshrl.u32 %v1155, 7
    %v1157 = vsub.s32 0, %v1156
    %v1158 = vrot.slane %v1153, %v1157
    %v1160 = vmul.f32 %v1062, %v1158
    %v1161 = vmul.f32 %v1063, %v1158
    %v1162 = vmul.f32 %v1064, %v1158
    %v1163 = vmul.f32 %v1065, %v1158
    %v1164 = vld [vmem:[%s6] sm:$0x1]
    %v1166 = vlaneseq
    %v1167 = vshrl.u32 %v1166, 7
    %v1168 = vsub.s32 0, %v1167
    %v1169 = vrot.slane %v1164, %v1168
    %v1171 = vadd.f32 %v1160, %v1169
    %v1172 = vadd.f32 %v1161, %v1169
    %v1173 = vadd.f32 %v1162, %v1169
    %v1174 = vadd.f32 %v1163, %v1169
    %v1175 = vmax.f32 %v1171, 0.0
    %v1176 = vmax.f32 %v1172, 0.0
    %v1177 = vmax.f32 %v1173, 0.0
    %v1178 = vmax.f32 %v1174, 0.0
    %1179 = vst [vmem:[#allocation12] sm:$0xff] %v1175
    %1180 = vst [vmem:[#allocation12 + $0x8] sm:$0xff] %v1176
    %1181 = vst [vmem:[#allocation12 + $0x10] sm:$0xff] %v1177
    %1182 = vst [vmem:[#allocation12 + $0x18] sm:$0xff] %v1178
    // Predicated region
    $region50: #{tpu_custom_call.1} parent=1 // pred_check
      _
    $region51: #{tpu_custom_call.1} parent=1 // pred_check_branch
      %1184 = sbr.rel (0) target = $region53
    $region52: #{tpu_custom_call.1} parent=1 // pred_region
      %s1186 = ssub.s32 512, 512
      %1187 = vsyncadd [#allocation6], %s1186
      %s1188 = sshll.u32 [#allocation12], 4
      %s1189 = int_to_ptr.vmem [resolvable:$true] %s1188
      %1194 = dma.vmem_to_hbm [thread:$0]  %s1189, 512, %s8, [#allocation6], 128, 128, 8
    $region53: #{tpu_custom_call.1} parent=1 // pred_fallthru
      _
    // Predicated region
    $region54: #{tpu_custom_call.1} parent=1 // pred_check
      _
    $region55: #{tpu_custom_call.1} parent=1 // pred_check_branch
      %1196 = sbr.rel (0) target = $region57
    $region56: #{tpu_custom_call.1} parent=1 // pred_region
      %1197 = dma.done [#allocation6], 512
    $region57: #{tpu_custom_call.1} parent=1 // pred_fallthru
      _
    %1198 = vsyncpa [#allocation5], 1
    %1199 = vsyncpa [#allocation8], 1
    %1200 = vsyncpa [#allocation11], 1
    %1201 = vsyncpa [#allocation6], 1

</llo_original>
